<compile_context>
chip_gen: v7x
topology: tpu7x:2x2x1
jax: 0.10.0
libtpu: 0.0.40
codegen_flags: <defaults>
</compile_context>

<pallas_src>
import functools
import math

import jax
import jax.numpy as jnp
from jax import lax
from jax.experimental import pallas as pl
from jax.experimental.pallas import tpu as pltpu


OC = 8       # conv output channels
IC = 3       # conv input channels
KS = 5       # conv kernel size
PAD = KS // 2


# ------------------------------ Pallas kernel ------------------------------

def _mm_pa_kernel(ee_ref, eo_ref, oe_ref, oo_ref, bmat_ref, out_ref,
                  sp_ref, a_ref, *, hs, ws):
    """Fused 3x3/s2/p1 max-pool + 5x5 conv (as one MXU matmul) + L2 distance.

    ee/eo/oe/oo: (1, 4, 3, hs+1, ws+1) even/odd row/col parity planes of the
                 -inf padded frames [t-5, t-4, t-3, t-1].
    bmat:        (IC*KS*(ws+4), OC*ws) weight-only Toeplitz matrix,
                 B[(c,kh,p),(o,w)] = W[o,c,kh,p-w] (0 if p-w outside [0,KS)).
    out:         (1, 3*hs, ws) per-pixel L2 distances, rows = (frame, h).
    """
    wp = ws + 2 * PAD

    # ---- max-pool from the parity planes (pure VPU, unit-stride slices) ----
    ee = ee_ref[0]
    eo = eo_ref[0]
    oe = oe_ref[0]
    oo = oo_ref[0]
    cm_e = jnp.maximum(jnp.maximum(ee[..., :ws], eo[..., :ws]), ee[..., 1:ws + 1])
    cm_o = jnp.maximum(jnp.maximum(oe[..., :ws], oo[..., :ws]), oe[..., 1:ws + 1])
    pooled = jnp.maximum(jnp.maximum(cm_e[..., :hs, :], cm_o[..., :hs, :]),
                         cm_e[..., 1:hs + 1, :])              # (4, 3, hs, ws)

    # conv is linear and the bias cancels in the pairwise difference, so
    # convolve the 3 frame-differences directly.
    dp = pooled[0:3] - pooled[3:4]                            # (3, 3, hs, ws)

    # zero-padded (pad=2) diff frames: (3, IC, hs+4, ws+4)
    sp_ref[...] = jnp.zeros(sp_ref.shape, sp_ref.dtype)
    sp_ref[:, :, PAD:PAD + hs, PAD:PAD + ws] = dp

    # ---- build LHS A[(f,h), (c,kh,p)] = sp[f, c, h+kh, p] in VMEM ----------
    for f in range(3):
        for c in range(IC):
            for kh in range(KS):
                col = (c * KS + kh) * wp
                a_ref[f * hs:(f + 1) * hs, col:col + wp] = sp_ref[f, c, kh:kh + hs, :]

    # ---- one MXU matmul: (3*hs, IC*KS*wp) @ (IC*KS*wp, OC*ws) --------------
    conv = jnp.dot(a_ref[...], bmat_ref[...],
                   preferred_element_type=jnp.float32)        # [(f,h), (o,w)]

    # ---- PairwiseDistance(p=2, eps=1e-6) over the OC channel groups --------
    y = conv + 1e-6
    sq = y * y
    s = sq[:, 0:ws]
    for o in range(1, OC):
        s = s + sq[:, o * ws:(o + 1) * ws]
    out_ref[0] = jnp.sqrt(s)                                  # single store


# ------------------------------ forward pass -------------------------------

def _build_bmat(conv_w, ws):
    """Weight-only Toeplitz RHS: B[(c,kh,p),(o,w)] = W[o,c,kh,p-w] or 0."""
    wp = ws + 2 * PAD
    p_minus_w = jnp.arange(wp)[:, None] - jnp.arange(ws)[None, :]     # (wp, ws)
    valid = (p_minus_w >= 0) & (p_minus_w < KS)
    kwc = jnp.clip(p_minus_w, 0, KS - 1)
    bf = conv_w[:, :, :, kwc]                                         # (OC,IC,KS,wp,ws)
    bf = jnp.where(valid[None, None, None], bf, 0.0)
    return jnp.transpose(bf, (1, 2, 3, 0, 4)).reshape(IC * KS * wp, OC * ws)


def mm_pa_forward(x, conv_w, conv_b, n_length=5):
    """x: (N, 3*n_length, H, W) float32 NCHW.  Returns (mm, x_rgb)."""
    del conv_b  # bias cancels inside the pairwise difference (conv is affine)
    N, C, H, W = x.shape
    assert C == 3 * n_length and n_length >= 5
    assert H % 2 == 0 and W % 2 == 0
    x_rgb = x[:, -3:, :, :]

    hs = (H + 2 - 3) // 2 + 1
    ws = (W + 2 - 3) // 2 + 1
    wp = ws + 2 * PAD

    # frames actually used by the distance loop: x[:, -5+i] (i=0..2) and x[:, -1]
    fr = x.reshape(N, n_length, 3, H, W)
    base = n_length - 5
    frames = jnp.concatenate([fr[:, base:base + 3], fr[:, n_length - 1:]], axis=1)

    # -inf pad for the pool, then split into even/odd row/col parity planes so
    # the stride-2 pooling becomes unit-stride maxes inside the kernel.
    xp = jnp.pad(frames, ((0, 0), (0, 0), (0, 0), (1, 1), (1, 1)),
                 constant_values=-jnp.inf)
    ee = xp[..., 0::2, 0::2]
    eo = xp[..., 0::2, 1::2]
    oe = xp[..., 1::2, 0::2]
    oo = xp[..., 1::2, 1::2]                                  # (N, 4, 3, hs+1, ws+1)

    bmat = _build_bmat(conv_w, ws)                            # (IC*KS*wp, OC*ws)

    par_spec = pl.BlockSpec((1, 4, 3, hs + 1, ws + 1), lambda n: (n, 0, 0, 0, 0))
    d = pl.pallas_call(
        functools.partial(_mm_pa_kernel, hs=hs, ws=ws),
        out_shape=jax.ShapeDtypeStruct((N, 3 * hs, ws), jnp.float32),
        grid=(N,),
        in_specs=[par_spec, par_spec, par_spec, par_spec,
                  pl.BlockSpec((IC * KS * wp, OC * ws), lambda n: (0, 0))],
        out_specs=pl.BlockSpec((1, 3 * hs, ws), lambda n: (n, 0, 0)),
        scratch_shapes=[
            pltpu.VMEM((3, IC, hs + 2 * PAD, wp), jnp.float32),   # padded diffs
            pltpu.VMEM((3 * hs, IC * KS * wp), jnp.float32),      # Toeplitz LHS
        ],
        compiler_params=pltpu.CompilerParams(dimension_semantics=("parallel",)),
    )(ee, eo, oe, oo, bmat)

    mm = d.reshape(N, 3, hs, ws)

    # F.interpolate(mode='nearest') back to (H, W): pure index gather (glue).
    ridx = (jnp.arange(H) * hs) // H
    cidx = (jnp.arange(W) * ws) // W
    mm = mm[:, :, ridx, :][:, :, :, cidx]
    return mm, x_rgb


# --------------------------- pure-JAX reference ----------------------------

def mm_pa_reference(x, conv_w, conv_b, n_length=5):
    N, C, H, W = x.shape
    x_rgb = x[:, -3:, :, :]
    frames = x.reshape(-1, 3, H, W)
    pooled = lax.reduce_window(frames, -jnp.inf, lax.max,
                               window_dimensions=(1, 1, 3, 3),
                               window_strides=(1, 1, 2, 2),
                               padding=((0, 0), (0, 0), (1, 1), (1, 1)))
    conv = lax.conv_general_dilated(pooled, conv_w, window_strides=(1, 1),
                                    padding=((2, 2), (2, 2)),
                                    dimension_numbers=('NCHW', 'OIHW', 'NCHW'))
    conv = conv + conv_b.reshape(1, -1, 1, 1)
    hs, ws = conv.shape[-2], conv.shape[-1]
    xr = conv.reshape(N, n_length, conv.shape[1], hs * ws)
    base = n_length - 5
    ds = []
    for i in range(3):
        diff = xr[:, base + i] - xr[:, -1] + 1e-6
        ds.append(jnp.sqrt(jnp.sum(diff * diff, axis=1))[:, None])
    mm = jnp.concatenate(ds, axis=1).reshape(N, 3, hs, ws)
    ridx = (jnp.arange(H) * hs) // H
    cidx = (jnp.arange(W) * ws) // W
    mm = mm[:, :, ridx, :][:, :, :, cidx]
    return mm, x_rgb


# ----------------------------------- main -----------------------------------

if __name__ == "__main__":
    key = jax.random.PRNGKey(0)
    kx, kw, kb = jax.random.split(key, 3)

    N, n_length, H, W = 2, 5, 16, 16
    x = jax.random.normal(kx, (N, 3 * n_length, H, W), dtype=jnp.float32)

    # Conv2d(3, 8, k=5) params (kaiming_normal fan_out -> std=0.1, torch-style bias)
    conv_w = 0.1 * jax.random.normal(kw, (8, 3, 5, 5), dtype=jnp.float32)
    bound = 1.0 / math.sqrt(3 * 5 * 5)
    conv_b = jax.random.uniform(kb, (8,), minval=-bound, maxval=bound,
                                dtype=jnp.float32)

    fwd = jax.jit(mm_pa_forward, static_argnums=3)
    mm, x_rgb = fwd(x, conv_w, conv_b, n_length)
    jax.block_until_ready((mm, x_rgb))

    mm_ref, x_rgb_ref = mm_pa_reference(x, conv_w, conv_b, n_length)
    assert mm.shape == (N, 3, H, W) and x_rgb.shape == (N, 3, H, W)
    assert jnp.allclose(mm, mm_ref, rtol=1e-4, atol=1e-4)
    assert jnp.allclose(x_rgb, x_rgb_ref)
    print("KERNEL_OK")
</pallas_src>

<mosaic_0001>
module attributes {stable_mosaic.version = 11 : i64} {
  func.func @_mm_pa_kernel(%arg0: i32, %arg1: memref<1x4x3x9x9xf32, #tpu.memory_space<vmem>>, %arg2: memref<1x4x3x9x9xf32, #tpu.memory_space<vmem>>, %arg3: memref<1x4x3x9x9xf32, #tpu.memory_space<vmem>>, %arg4: memref<1x4x3x9x9xf32, #tpu.memory_space<vmem>>, %arg5: memref<180x64xf32, #tpu.memory_space<vmem>>, %arg6: memref<1x24x8xf32, #tpu.memory_space<vmem>>, %arg7: memref<3x3x12x12xf32, #tpu.memory_space<vmem>>, %arg8: memref<24x180xf32, #tpu.memory_space<vmem>>) attributes {dimension_semantics = [#tpu.dimension_semantics<parallel>], iteration_bounds = array<i64: 2>, scalar_prefetch = 0 : i64, scratch_operands = 2 : i64, tpu.core_type = #tpu.core_type<tc>, window_params = [{transform_indices = @transform_0, window_bounds = array<i64: 1, 4, 3, 9, 9>}, {transform_indices = @transform_1, window_bounds = array<i64: 1, 4, 3, 9, 9>}, {transform_indices = @transform_2, window_bounds = array<i64: 1, 4, 3, 9, 9>}, {transform_indices = @transform_3, window_bounds = array<i64: 1, 4, 3, 9, 9>}, {pipeline_mode = #tpu.pipeline_mode<synchronous>, transform_indices = @transform_4, window_bounds = array<i64: 180, 64>}, {transform_indices = @transform_5, window_bounds = array<i64: 1, 24, 8>}]} {
    %c0 = arith.constant 0 : index
    %c0_0 = arith.constant 0 : index
    %c0_1 = arith.constant 0 : index
    %c0_2 = arith.constant 0 : index
    %c0_3 = arith.constant 0 : index
    %0 = vector.load %arg1[%c0, %c0_0, %c0_1, %c0_2, %c0_3] : memref<1x4x3x9x9xf32, #tpu.memory_space<vmem>>, vector<1x4x3x9x9xf32>
    %1 = vector.shape_cast %0 : vector<1x4x3x9x9xf32> to vector<4x3x9x9xf32>
    %c0_4 = arith.constant 0 : index
    %c0_5 = arith.constant 0 : index
    %c0_6 = arith.constant 0 : index
    %c0_7 = arith.constant 0 : index
    %c0_8 = arith.constant 0 : index
    %2 = vector.load %arg2[%c0_4, %c0_5, %c0_6, %c0_7, %c0_8] : memref<1x4x3x9x9xf32, #tpu.memory_space<vmem>>, vector<1x4x3x9x9xf32>
    %3 = vector.shape_cast %2 : vector<1x4x3x9x9xf32> to vector<4x3x9x9xf32>
    %c0_9 = arith.constant 0 : index
    %c0_10 = arith.constant 0 : index
    %c0_11 = arith.constant 0 : index
    %c0_12 = arith.constant 0 : index
    %c0_13 = arith.constant 0 : index
    %4 = vector.load %arg3[%c0_9, %c0_10, %c0_11, %c0_12, %c0_13] : memref<1x4x3x9x9xf32, #tpu.memory_space<vmem>>, vector<1x4x3x9x9xf32>
    %5 = vector.shape_cast %4 : vector<1x4x3x9x9xf32> to vector<4x3x9x9xf32>
    %c0_14 = arith.constant 0 : index
    %c0_15 = arith.constant 0 : index
    %c0_16 = arith.constant 0 : index
    %c0_17 = arith.constant 0 : index
    %c0_18 = arith.constant 0 : index
    %6 = vector.load %arg4[%c0_14, %c0_15, %c0_16, %c0_17, %c0_18] : memref<1x4x3x9x9xf32, #tpu.memory_space<vmem>>, vector<1x4x3x9x9xf32>
    %7 = vector.shape_cast %6 : vector<1x4x3x9x9xf32> to vector<4x3x9x9xf32>
    %8 = vector.extract_strided_slice %1 {offsets = [0, 0, 0, 0], sizes = [4, 3, 9, 8], strides = [1, 1, 1, 1]} : vector<4x3x9x9xf32> to vector<4x3x9x8xf32>
    %9 = vector.extract_strided_slice %3 {offsets = [0, 0, 0, 0], sizes = [4, 3, 9, 8], strides = [1, 1, 1, 1]} : vector<4x3x9x9xf32> to vector<4x3x9x8xf32>
    %10 = arith.maximumf %8, %9 : vector<4x3x9x8xf32>
    %11 = vector.extract_strided_slice %1 {offsets = [0, 0, 0, 1], sizes = [4, 3, 9, 8], strides = [1, 1, 1, 1]} : vector<4x3x9x9xf32> to vector<4x3x9x8xf32>
    %12 = arith.maximumf %10, %11 : vector<4x3x9x8xf32>
    %13 = vector.extract_strided_slice %5 {offsets = [0, 0, 0, 0], sizes = [4, 3, 9, 8], strides = [1, 1, 1, 1]} : vector<4x3x9x9xf32> to vector<4x3x9x8xf32>
    %14 = vector.extract_strided_slice %7 {offsets = [0, 0, 0, 0], sizes = [4, 3, 9, 8], strides = [1, 1, 1, 1]} : vector<4x3x9x9xf32> to vector<4x3x9x8xf32>
    %15 = arith.maximumf %13, %14 : vector<4x3x9x8xf32>
    %16 = vector.extract_strided_slice %5 {offsets = [0, 0, 0, 1], sizes = [4, 3, 9, 8], strides = [1, 1, 1, 1]} : vector<4x3x9x9xf32> to vector<4x3x9x8xf32>
    %17 = arith.maximumf %15, %16 : vector<4x3x9x8xf32>
    %18 = vector.extract_strided_slice %12 {offsets = [0, 0, 0, 0], sizes = [4, 3, 8, 8], strides = [1, 1, 1, 1]} : vector<4x3x9x8xf32> to vector<4x3x8x8xf32>
    %19 = vector.extract_strided_slice %17 {offsets = [0, 0, 0, 0], sizes = [4, 3, 8, 8], strides = [1, 1, 1, 1]} : vector<4x3x9x8xf32> to vector<4x3x8x8xf32>
    %20 = arith.maximumf %18, %19 : vector<4x3x8x8xf32>
    %21 = vector.extract_strided_slice %12 {offsets = [0, 0, 1, 0], sizes = [4, 3, 8, 8], strides = [1, 1, 1, 1]} : vector<4x3x9x8xf32> to vector<4x3x8x8xf32>
    %22 = arith.maximumf %20, %21 : vector<4x3x8x8xf32>
    %23 = vector.extract_strided_slice %22 {offsets = [0, 0, 0, 0], sizes = [3, 3, 8, 8], strides = [1, 1, 1, 1]} : vector<4x3x8x8xf32> to vector<3x3x8x8xf32>
    %24 = vector.extract_strided_slice %22 {offsets = [3, 0, 0, 0], sizes = [1, 3, 8, 8], strides = [1, 1, 1, 1]} : vector<4x3x8x8xf32> to vector<1x3x8x8xf32>
    %25 = vector.broadcast %24 : vector<1x3x8x8xf32> to vector<3x3x8x8xf32>
    %26 = arith.subf %23, %25 : vector<3x3x8x8xf32>
    %cst = arith.constant 0.000000e+00 : f32
    %27 = vector.broadcast %cst : f32 to vector<3x3x12x12xf32>
    %c0_19 = arith.constant 0 : index
    %c0_20 = arith.constant 0 : index
    %c0_21 = arith.constant 0 : index
    %c0_22 = arith.constant 0 : index
    %28 = vector.load %arg7[%c0_19, %c0_20, %c0_21, %c0_22] : memref<3x3x12x12xf32, #tpu.memory_space<vmem>>, vector<3x3x12x12xf32>
    tpu.vector_store %arg7[%c0_19, %c0_20, %c0_21, %c0_22], %27 {strides = array<i32>} : memref<3x3x12x12xf32, #tpu.memory_space<vmem>>, vector<3x3x12x12xf32>,
    %c0_23 = arith.constant 0 : index
    %c0_24 = arith.constant 0 : index
    %c2 = arith.constant 2 : index
    %c2_25 = arith.constant 2 : index
    %29 = vector.load %arg7[%c0_23, %c0_24, %c2, %c2_25] : memref<3x3x12x12xf32, #tpu.memory_space<vmem>>, vector<3x3x8x8xf32>
    tpu.vector_store %arg7[%c0_23, %c0_24, %c2, %c2_25], %26 {strides = array<i32>} : memref<3x3x12x12xf32, #tpu.memory_space<vmem>>, vector<3x3x8x8xf32>,
    %c0_26 = arith.constant 0 : index
    %c0_27 = arith.constant 0 : index
    %c0_28 = arith.constant 0 : index
    %c0_29 = arith.constant 0 : index
    %30 = vector.load %arg7[%c0_26, %c0_27, %c0_28, %c0_29] : memref<3x3x12x12xf32, #tpu.memory_space<vmem>>, vector<1x1x8x12xf32>
    %31 = vector.shape_cast %30 : vector<1x1x8x12xf32> to vector<8x12xf32>
    %c0_30 = arith.constant 0 : index
    %c0_31 = arith.constant 0 : index
    %32 = vector.load %arg8[%c0_30, %c0_31] : memref<24x180xf32, #tpu.memory_space<vmem>>, vector<8x12xf32>
    tpu.vector_store %arg8[%c0_30, %c0_31], %31 {strides = array<i32>} : memref<24x180xf32, #tpu.memory_space<vmem>>, vector<8x12xf32>,
    %c0_32 = arith.constant 0 : index
    %c0_33 = arith.constant 0 : index
    %c1 = arith.constant 1 : index
    %c0_34 = arith.constant 0 : index
    %33 = vector.load %arg7[%c0_32, %c0_33, %c1, %c0_34] : memref<3x3x12x12xf32, #tpu.memory_space<vmem>>, vector<1x1x8x12xf32>
    %34 = vector.shape_cast %33 : vector<1x1x8x12xf32> to vector<8x12xf32>
    %c0_35 = arith.constant 0 : index
    %c12 = arith.constant 12 : index
    %35 = vector.load %arg8[%c0_35, %c12] : memref<24x180xf32, #tpu.memory_space<vmem>>, vector<8x12xf32>
    tpu.vector_store %arg8[%c0_35, %c12], %34 {strides = array<i32>} : memref<24x180xf32, #tpu.memory_space<vmem>>, vector<8x12xf32>,
    %c0_36 = arith.constant 0 : index
    %c0_37 = arith.constant 0 : index
    %c2_38 = arith.constant 2 : index
    %c0_39 = arith.constant 0 : index
    %36 = vector.load %arg7[%c0_36, %c0_37, %c2_38, %c0_39] : memref<3x3x12x12xf32, #tpu.memory_space<vmem>>, vector<1x1x8x12xf32>
    %37 = vector.shape_cast %36 : vector<1x1x8x12xf32> to vector<8x12xf32>
    %c0_40 = arith.constant 0 : index
    %c24 = arith.constant 24 : index
    %38 = vector.load %arg8[%c0_40, %c24] : memref<24x180xf32, #tpu.memory_space<vmem>>, vector<8x12xf32>
    tpu.vector_store %arg8[%c0_40, %c24], %37 {strides = array<i32>} : memref<24x180xf32, #tpu.memory_space<vmem>>, vector<8x12xf32>,
    %c0_41 = arith.constant 0 : index
    %c0_42 = arith.constant 0 : index
    %c3 = arith.constant 3 : index
    %c0_43 = arith.constant 0 : index
    %39 = vector.load %arg7[%c0_41, %c0_42, %c3, %c0_43] : memref<3x3x12x12xf32, #tpu.memory_space<vmem>>, vector<1x1x8x12xf32>
    %40 = vector.shape_cast %39 : vector<1x1x8x12xf32> to vector<8x12xf32>
    %c0_44 = arith.constant 0 : index
    %c36 = arith.constant 36 : index
    %41 = vector.load %arg8[%c0_44, %c36] : memref<24x180xf32, #tpu.memory_space<vmem>>, vector<8x12xf32>
    tpu.vector_store %arg8[%c0_44, %c36], %40 {strides = array<i32>} : memref<24x180xf32, #tpu.memory_space<vmem>>, vector<8x12xf32>,
    %c0_45 = arith.constant 0 : index
    %c0_46 = arith.constant 0 : index
    %c4 = arith.constant 4 : index
    %c0_47 = arith.constant 0 : index
    %42 = vector.load %arg7[%c0_45, %c0_46, %c4, %c0_47] : memref<3x3x12x12xf32, #tpu.memory_space<vmem>>, vector<1x1x8x12xf32>
    %43 = vector.shape_cast %42 : vector<1x1x8x12xf32> to vector<8x12xf32>
    %c0_48 = arith.constant 0 : index
    %c48 = arith.constant 48 : index
    %44 = vector.load %arg8[%c0_48, %c48] : memref<24x180xf32, #tpu.memory_space<vmem>>, vector<8x12xf32>
    tpu.vector_store %arg8[%c0_48, %c48], %43 {strides = array<i32>} : memref<24x180xf32, #tpu.memory_space<vmem>>, vector<8x12xf32>,
    %c0_49 = arith.constant 0 : index
    %c1_50 = arith.constant 1 : index
    %c0_51 = arith.constant 0 : index
    %c0_52 = arith.constant 0 : index
    %45 = vector.load %arg7[%c0_49, %c1_50, %c0_51, %c0_52] : memref<3x3x12x12xf32, #tpu.memory_space<vmem>>, vector<1x1x8x12xf32>
    %46 = vector.shape_cast %45 : vector<1x1x8x12xf32> to vector<8x12xf32>
    %c0_53 = arith.constant 0 : index
    %c60 = arith.constant 60 : index
    %47 = vector.load %arg8[%c0_53, %c60] : memref<24x180xf32, #tpu.memory_space<vmem>>, vector<8x12xf32>
    tpu.vector_store %arg8[%c0_53, %c60], %46 {strides = array<i32>} : memref<24x180xf32, #tpu.memory_space<vmem>>, vector<8x12xf32>,
    %c0_54 = arith.constant 0 : index
    %c1_55 = arith.constant 1 : index
    %c1_56 = arith.constant 1 : index
    %c0_57 = arith.constant 0 : index
    %48 = vector.load %arg7[%c0_54, %c1_55, %c1_56, %c0_57] : memref<3x3x12x12xf32, #tpu.memory_space<vmem>>, vector<1x1x8x12xf32>
    %49 = vector.shape_cast %48 : vector<1x1x8x12xf32> to vector<8x12xf32>
    %c0_58 = arith.constant 0 : index
    %c72 = arith.constant 72 : index
    %50 = vector.load %arg8[%c0_58, %c72] : memref<24x180xf32, #tpu.memory_space<vmem>>, vector<8x12xf32>
    tpu.vector_store %arg8[%c0_58, %c72], %49 {strides = array<i32>} : memref<24x180xf32, #tpu.memory_space<vmem>>, vector<8x12xf32>,
    %c0_59 = arith.constant 0 : index
    %c1_60 = arith.constant 1 : index
    %c2_61 = arith.constant 2 : index
    %c0_62 = arith.constant 0 : index
    %51 = vector.load %arg7[%c0_59, %c1_60, %c2_61, %c0_62] : memref<3x3x12x12xf32, #tpu.memory_space<vmem>>, vector<1x1x8x12xf32>
    %52 = vector.shape_cast %51 : vector<1x1x8x12xf32> to vector<8x12xf32>
    %c0_63 = arith.constant 0 : index
    %c84 = arith.constant 84 : index
    %53 = vector.load %arg8[%c0_63, %c84] : memref<24x180xf32, #tpu.memory_space<vmem>>, vector<8x12xf32>
    tpu.vector_store %arg8[%c0_63, %c84], %52 {strides = array<i32>} : memref<24x180xf32, #tpu.memory_space<vmem>>, vector<8x12xf32>,
    %c0_64 = arith.constant 0 : index
    %c1_65 = arith.constant 1 : index
    %c3_66 = arith.constant 3 : index
    %c0_67 = arith.constant 0 : index
    %54 = vector.load %arg7[%c0_64, %c1_65, %c3_66, %c0_67] : memref<3x3x12x12xf32, #tpu.memory_space<vmem>>, vector<1x1x8x12xf32>
    %55 = vector.shape_cast %54 : vector<1x1x8x12xf32> to vector<8x12xf32>
    %c0_68 = arith.constant 0 : index
    %c96 = arith.constant 96 : index
    %56 = vector.load %arg8[%c0_68, %c96] : memref<24x180xf32, #tpu.memory_space<vmem>>, vector<8x12xf32>
    tpu.vector_store %arg8[%c0_68, %c96], %55 {strides = array<i32>} : memref<24x180xf32, #tpu.memory_space<vmem>>, vector<8x12xf32>,
    %c0_69 = arith.constant 0 : index
    %c1_70 = arith.constant 1 : index
    %c4_71 = arith.constant 4 : index
    %c0_72 = arith.constant 0 : index
    %57 = vector.load %arg7[%c0_69, %c1_70, %c4_71, %c0_72] : memref<3x3x12x12xf32, #tpu.memory_space<vmem>>, vector<1x1x8x12xf32>
    %58 = vector.shape_cast %57 : vector<1x1x8x12xf32> to vector<8x12xf32>
    %c0_73 = arith.constant 0 : index
    %c108 = arith.constant 108 : index
    %59 = vector.load %arg8[%c0_73, %c108] : memref<24x180xf32, #tpu.memory_space<vmem>>, vector<8x12xf32>
    tpu.vector_store %arg8[%c0_73, %c108], %58 {strides = array<i32>} : memref<24x180xf32, #tpu.memory_space<vmem>>, vector<8x12xf32>,
    %c0_74 = arith.constant 0 : index
    %c2_75 = arith.constant 2 : index
    %c0_76 = arith.constant 0 : index
    %c0_77 = arith.constant 0 : index
    %60 = vector.load %arg7[%c0_74, %c2_75, %c0_76, %c0_77] : memref<3x3x12x12xf32, #tpu.memory_space<vmem>>, vector<1x1x8x12xf32>
    %61 = vector.shape_cast %60 : vector<1x1x8x12xf32> to vector<8x12xf32>
    %c0_78 = arith.constant 0 : index
    %c120 = arith.constant 120 : index
    %62 = vector.load %arg8[%c0_78, %c120] : memref<24x180xf32, #tpu.memory_space<vmem>>, vector<8x12xf32>
    tpu.vector_store %arg8[%c0_78, %c120], %61 {strides = array<i32>} : memref<24x180xf32, #tpu.memory_space<vmem>>, vector<8x12xf32>,
    %c0_79 = arith.constant 0 : index
    %c2_80 = arith.constant 2 : index
    %c1_81 = arith.constant 1 : index
    %c0_82 = arith.constant 0 : index
    %63 = vector.load %arg7[%c0_79, %c2_80, %c1_81, %c0_82] : memref<3x3x12x12xf32, #tpu.memory_space<vmem>>, vector<1x1x8x12xf32>
    %64 = vector.shape_cast %63 : vector<1x1x8x12xf32> to vector<8x12xf32>
    %c0_83 = arith.constant 0 : index
    %c132 = arith.constant 132 : index
    %65 = vector.load %arg8[%c0_83, %c132] : memref<24x180xf32, #tpu.memory_space<vmem>>, vector<8x12xf32>
    tpu.vector_store %arg8[%c0_83, %c132], %64 {strides = array<i32>} : memref<24x180xf32, #tpu.memory_space<vmem>>, vector<8x12xf32>,
    %c0_84 = arith.constant 0 : index
    %c2_85 = arith.constant 2 : index
    %c2_86 = arith.constant 2 : index
    %c0_87 = arith.constant 0 : index
    %66 = vector.load %arg7[%c0_84, %c2_85, %c2_86, %c0_87] : memref<3x3x12x12xf32, #tpu.memory_space<vmem>>, vector<1x1x8x12xf32>
    %67 = vector.shape_cast %66 : vector<1x1x8x12xf32> to vector<8x12xf32>
    %c0_88 = arith.constant 0 : index
    %c144 = arith.constant 144 : index
    %68 = vector.load %arg8[%c0_88, %c144] : memref<24x180xf32, #tpu.memory_space<vmem>>, vector<8x12xf32>
    tpu.vector_store %arg8[%c0_88, %c144], %67 {strides = array<i32>} : memref<24x180xf32, #tpu.memory_space<vmem>>, vector<8x12xf32>,
    %c0_89 = arith.constant 0 : index
    %c2_90 = arith.constant 2 : index
    %c3_91 = arith.constant 3 : index
    %c0_92 = arith.constant 0 : index
    %69 = vector.load %arg7[%c0_89, %c2_90, %c3_91, %c0_92] : memref<3x3x12x12xf32, #tpu.memory_space<vmem>>, vector<1x1x8x12xf32>
    %70 = vector.shape_cast %69 : vector<1x1x8x12xf32> to vector<8x12xf32>
    %c0_93 = arith.constant 0 : index
    %c156 = arith.constant 156 : index
    %71 = vector.load %arg8[%c0_93, %c156] : memref<24x180xf32, #tpu.memory_space<vmem>>, vector<8x12xf32>
    tpu.vector_store %arg8[%c0_93, %c156], %70 {strides = array<i32>} : memref<24x180xf32, #tpu.memory_space<vmem>>, vector<8x12xf32>,
    %c0_94 = arith.constant 0 : index
    %c2_95 = arith.constant 2 : index
    %c4_96 = arith.constant 4 : index
    %c0_97 = arith.constant 0 : index
    %72 = vector.load %arg7[%c0_94, %c2_95, %c4_96, %c0_97] : memref<3x3x12x12xf32, #tpu.memory_space<vmem>>, vector<1x1x8x12xf32>
    %73 = vector.shape_cast %72 : vector<1x1x8x12xf32> to vector<8x12xf32>
    %c0_98 = arith.constant 0 : index
    %c168 = arith.constant 168 : index
    %74 = vector.load %arg8[%c0_98, %c168] : memref<24x180xf32, #tpu.memory_space<vmem>>, vector<8x12xf32>
    tpu.vector_store %arg8[%c0_98, %c168], %73 {strides = array<i32>} : memref<24x180xf32, #tpu.memory_space<vmem>>, vector<8x12xf32>,
    %c1_99 = arith.constant 1 : index
    %c0_100 = arith.constant 0 : index
    %c0_101 = arith.constant 0 : index
    %c0_102 = arith.constant 0 : index
    %75 = vector.load %arg7[%c1_99, %c0_100, %c0_101, %c0_102] : memref<3x3x12x12xf32, #tpu.memory_space<vmem>>, vector<1x1x8x12xf32>
    %76 = vector.shape_cast %75 : vector<1x1x8x12xf32> to vector<8x12xf32>
    %c8 = arith.constant 8 : index
    %c0_103 = arith.constant 0 : index
    %77 = vector.load %arg8[%c8, %c0_103] : memref<24x180xf32, #tpu.memory_space<vmem>>, vector<8x12xf32>
    tpu.vector_store %arg8[%c8, %c0_103], %76 {strides = array<i32>} : memref<24x180xf32, #tpu.memory_space<vmem>>, vector<8x12xf32>,
    %c1_104 = arith.constant 1 : index
    %c0_105 = arith.constant 0 : index
    %c1_106 = arith.constant 1 : index
    %c0_107 = arith.constant 0 : index
    %78 = vector.load %arg7[%c1_104, %c0_105, %c1_106, %c0_107] : memref<3x3x12x12xf32, #tpu.memory_space<vmem>>, vector<1x1x8x12xf32>
    %79 = vector.shape_cast %78 : vector<1x1x8x12xf32> to vector<8x12xf32>
    %c8_108 = arith.constant 8 : index
    %c12_109 = arith.constant 12 : index
    %80 = vector.load %arg8[%c8_108, %c12_109] : memref<24x180xf32, #tpu.memory_space<vmem>>, vector<8x12xf32>
    tpu.vector_store %arg8[%c8_108, %c12_109], %79 {strides = array<i32>} : memref<24x180xf32, #tpu.memory_space<vmem>>, vector<8x12xf32>,
    %c1_110 = arith.constant 1 : index
    %c0_111 = arith.constant 0 : index
    %c2_112 = arith.constant 2 : index
    %c0_113 = arith.constant 0 : index
    %81 = vector.load %arg7[%c1_110, %c0_111, %c2_112, %c0_113] : memref<3x3x12x12xf32, #tpu.memory_space<vmem>>, vector<1x1x8x12xf32>
    %82 = vector.shape_cast %81 : vector<1x1x8x12xf32> to vector<8x12xf32>
    %c8_114 = arith.constant 8 : index
    %c24_115 = arith.constant 24 : index
    %83 = vector.load %arg8[%c8_114, %c24_115] : memref<24x180xf32, #tpu.memory_space<vmem>>, vector<8x12xf32>
    tpu.vector_store %arg8[%c8_114, %c24_115], %82 {strides = array<i32>} : memref<24x180xf32, #tpu.memory_space<vmem>>, vector<8x12xf32>,
    %c1_116 = arith.constant 1 : index
    %c0_117 = arith.constant 0 : index
    %c3_118 = arith.constant 3 : index
    %c0_119 = arith.constant 0 : index
    %84 = vector.load %arg7[%c1_116, %c0_117, %c3_118, %c0_119] : memref<3x3x12x12xf32, #tpu.memory_space<vmem>>, vector<1x1x8x12xf32>
    %85 = vector.shape_cast %84 : vector<1x1x8x12xf32> to vector<8x12xf32>
    %c8_120 = arith.constant 8 : index
    %c36_121 = arith.constant 36 : index
    %86 = vector.load %arg8[%c8_120, %c36_121] : memref<24x180xf32, #tpu.memory_space<vmem>>, vector<8x12xf32>
    tpu.vector_store %arg8[%c8_120, %c36_121], %85 {strides = array<i32>} : memref<24x180xf32, #tpu.memory_space<vmem>>, vector<8x12xf32>,
    %c1_122 = arith.constant 1 : index
    %c0_123 = arith.constant 0 : index
    %c4_124 = arith.constant 4 : index
    %c0_125 = arith.constant 0 : index
    %87 = vector.load %arg7[%c1_122, %c0_123, %c4_124, %c0_125] : memref<3x3x12x12xf32, #tpu.memory_space<vmem>>, vector<1x1x8x12xf32>
    %88 = vector.shape_cast %87 : vector<1x1x8x12xf32> to vector<8x12xf32>
    %c8_126 = arith.constant 8 : index
    %c48_127 = arith.constant 48 : index
    %89 = vector.load %arg8[%c8_126, %c48_127] : memref<24x180xf32, #tpu.memory_space<vmem>>, vector<8x12xf32>
    tpu.vector_store %arg8[%c8_126, %c48_127], %88 {strides = array<i32>} : memref<24x180xf32, #tpu.memory_space<vmem>>, vector<8x12xf32>,
    %c1_128 = arith.constant 1 : index
    %c1_129 = arith.constant 1 : index
    %c0_130 = arith.constant 0 : index
    %c0_131 = arith.constant 0 : index
    %90 = vector.load %arg7[%c1_128, %c1_129, %c0_130, %c0_131] : memref<3x3x12x12xf32, #tpu.memory_space<vmem>>, vector<1x1x8x12xf32>
    %91 = vector.shape_cast %90 : vector<1x1x8x12xf32> to vector<8x12xf32>
    %c8_132 = arith.constant 8 : index
    %c60_133 = arith.constant 60 : index
    %92 = vector.load %arg8[%c8_132, %c60_133] : memref<24x180xf32, #tpu.memory_space<vmem>>, vector<8x12xf32>
    tpu.vector_store %arg8[%c8_132, %c60_133], %91 {strides = array<i32>} : memref<24x180xf32, #tpu.memory_space<vmem>>, vector<8x12xf32>,
    %c1_134 = arith.constant 1 : index
    %c1_135 = arith.constant 1 : index
    %c1_136 = arith.constant 1 : index
    %c0_137 = arith.constant 0 : index
    %93 = vector.load %arg7[%c1_134, %c1_135, %c1_136, %c0_137] : memref<3x3x12x12xf32, #tpu.memory_space<vmem>>, vector<1x1x8x12xf32>
    %94 = vector.shape_cast %93 : vector<1x1x8x12xf32> to vector<8x12xf32>
    %c8_138 = arith.constant 8 : index
    %c72_139 = arith.constant 72 : index
    %95 = vector.load %arg8[%c8_138, %c72_139] : memref<24x180xf32, #tpu.memory_space<vmem>>, vector<8x12xf32>
    tpu.vector_store %arg8[%c8_138, %c72_139], %94 {strides = array<i32>} : memref<24x180xf32, #tpu.memory_space<vmem>>, vector<8x12xf32>,
    %c1_140 = arith.constant 1 : index
    %c1_141 = arith.constant 1 : index
    %c2_142 = arith.constant 2 : index
    %c0_143 = arith.constant 0 : index
    %96 = vector.load %arg7[%c1_140, %c1_141, %c2_142, %c0_143] : memref<3x3x12x12xf32, #tpu.memory_space<vmem>>, vector<1x1x8x12xf32>
    %97 = vector.shape_cast %96 : vector<1x1x8x12xf32> to vector<8x12xf32>
    %c8_144 = arith.constant 8 : index
    %c84_145 = arith.constant 84 : index
    %98 = vector.load %arg8[%c8_144, %c84_145] : memref<24x180xf32, #tpu.memory_space<vmem>>, vector<8x12xf32>
    tpu.vector_store %arg8[%c8_144, %c84_145], %97 {strides = array<i32>} : memref<24x180xf32, #tpu.memory_space<vmem>>, vector<8x12xf32>,
    %c1_146 = arith.constant 1 : index
    %c1_147 = arith.constant 1 : index
    %c3_148 = arith.constant 3 : index
    %c0_149 = arith.constant 0 : index
    %99 = vector.load %arg7[%c1_146, %c1_147, %c3_148, %c0_149] : memref<3x3x12x12xf32, #tpu.memory_space<vmem>>, vector<1x1x8x12xf32>
    %100 = vector.shape_cast %99 : vector<1x1x8x12xf32> to vector<8x12xf32>
    %c8_150 = arith.constant 8 : index
    %c96_151 = arith.constant 96 : index
    %101 = vector.load %arg8[%c8_150, %c96_151] : memref<24x180xf32, #tpu.memory_space<vmem>>, vector<8x12xf32>
    tpu.vector_store %arg8[%c8_150, %c96_151], %100 {strides = array<i32>} : memref<24x180xf32, #tpu.memory_space<vmem>>, vector<8x12xf32>,
    %c1_152 = arith.constant 1 : index
    %c1_153 = arith.constant 1 : index
    %c4_154 = arith.constant 4 : index
    %c0_155 = arith.constant 0 : index
    %102 = vector.load %arg7[%c1_152, %c1_153, %c4_154, %c0_155] : memref<3x3x12x12xf32, #tpu.memory_space<vmem>>, vector<1x1x8x12xf32>
    %103 = vector.shape_cast %102 : vector<1x1x8x12xf32> to vector<8x12xf32>
    %c8_156 = arith.constant 8 : index
    %c108_157 = arith.constant 108 : index
    %104 = vector.load %arg8[%c8_156, %c108_157] : memref<24x180xf32, #tpu.memory_space<vmem>>, vector<8x12xf32>
    tpu.vector_store %arg8[%c8_156, %c108_157], %103 {strides = array<i32>} : memref<24x180xf32, #tpu.memory_space<vmem>>, vector<8x12xf32>,
    %c1_158 = arith.constant 1 : index
    %c2_159 = arith.constant 2 : index
    %c0_160 = arith.constant 0 : index
    %c0_161 = arith.constant 0 : index
    %105 = vector.load %arg7[%c1_158, %c2_159, %c0_160, %c0_161] : memref<3x3x12x12xf32, #tpu.memory_space<vmem>>, vector<1x1x8x12xf32>
    %106 = vector.shape_cast %105 : vector<1x1x8x12xf32> to vector<8x12xf32>
    %c8_162 = arith.constant 8 : index
    %c120_163 = arith.constant 120 : index
    %107 = vector.load %arg8[%c8_162, %c120_163] : memref<24x180xf32, #tpu.memory_space<vmem>>, vector<8x12xf32>
    tpu.vector_store %arg8[%c8_162, %c120_163], %106 {strides = array<i32>} : memref<24x180xf32, #tpu.memory_space<vmem>>, vector<8x12xf32>,
    %c1_164 = arith.constant 1 : index
    %c2_165 = arith.constant 2 : index
    %c1_166 = arith.constant 1 : index
    %c0_167 = arith.constant 0 : index
    %108 = vector.load %arg7[%c1_164, %c2_165, %c1_166, %c0_167] : memref<3x3x12x12xf32, #tpu.memory_space<vmem>>, vector<1x1x8x12xf32>
    %109 = vector.shape_cast %108 : vector<1x1x8x12xf32> to vector<8x12xf32>
    %c8_168 = arith.constant 8 : index
    %c132_169 = arith.constant 132 : index
    %110 = vector.load %arg8[%c8_168, %c132_169] : memref<24x180xf32, #tpu.memory_space<vmem>>, vector<8x12xf32>
    tpu.vector_store %arg8[%c8_168, %c132_169], %109 {strides = array<i32>} : memref<24x180xf32, #tpu.memory_space<vmem>>, vector<8x12xf32>,
    %c1_170 = arith.constant 1 : index
    %c2_171 = arith.constant 2 : index
    %c2_172 = arith.constant 2 : index
    %c0_173 = arith.constant 0 : index
    %111 = vector.load %arg7[%c1_170, %c2_171, %c2_172, %c0_173] : memref<3x3x12x12xf32, #tpu.memory_space<vmem>>, vector<1x1x8x12xf32>
    %112 = vector.shape_cast %111 : vector<1x1x8x12xf32> to vector<8x12xf32>
    %c8_174 = arith.constant 8 : index
    %c144_175 = arith.constant 144 : index
    %113 = vector.load %arg8[%c8_174, %c144_175] : memref<24x180xf32, #tpu.memory_space<vmem>>, vector<8x12xf32>
    tpu.vector_store %arg8[%c8_174, %c144_175], %112 {strides = array<i32>} : memref<24x180xf32, #tpu.memory_space<vmem>>, vector<8x12xf32>,
    %c1_176 = arith.constant 1 : index
    %c2_177 = arith.constant 2 : index
    %c3_178 = arith.constant 3 : index
    %c0_179 = arith.constant 0 : index
    %114 = vector.load %arg7[%c1_176, %c2_177, %c3_178, %c0_179] : memref<3x3x12x12xf32, #tpu.memory_space<vmem>>, vector<1x1x8x12xf32>
    %115 = vector.shape_cast %114 : vector<1x1x8x12xf32> to vector<8x12xf32>
    %c8_180 = arith.constant 8 : index
    %c156_181 = arith.constant 156 : index
    %116 = vector.load %arg8[%c8_180, %c156_181] : memref<24x180xf32, #tpu.memory_space<vmem>>, vector<8x12xf32>
    tpu.vector_store %arg8[%c8_180, %c156_181], %115 {strides = array<i32>} : memref<24x180xf32, #tpu.memory_space<vmem>>, vector<8x12xf32>,
    %c1_182 = arith.constant 1 : index
    %c2_183 = arith.constant 2 : index
    %c4_184 = arith.constant 4 : index
    %c0_185 = arith.constant 0 : index
    %117 = vector.load %arg7[%c1_182, %c2_183, %c4_184, %c0_185] : memref<3x3x12x12xf32, #tpu.memory_space<vmem>>, vector<1x1x8x12xf32>
    %118 = vector.shape_cast %117 : vector<1x1x8x12xf32> to vector<8x12xf32>
    %c8_186 = arith.constant 8 : index
    %c168_187 = arith.constant 168 : index
    %119 = vector.load %arg8[%c8_186, %c168_187] : memref<24x180xf32, #tpu.memory_space<vmem>>, vector<8x12xf32>
    tpu.vector_store %arg8[%c8_186, %c168_187], %118 {strides = array<i32>} : memref<24x180xf32, #tpu.memory_space<vmem>>, vector<8x12xf32>,
    %c2_188 = arith.constant 2 : index
    %c0_189 = arith.constant 0 : index
    %c0_190 = arith.constant 0 : index
    %c0_191 = arith.constant 0 : index
    %120 = vector.load %arg7[%c2_188, %c0_189, %c0_190, %c0_191] : memref<3x3x12x12xf32, #tpu.memory_space<vmem>>, vector<1x1x8x12xf32>
    %121 = vector.shape_cast %120 : vector<1x1x8x12xf32> to vector<8x12xf32>
    %c16 = arith.constant 16 : index
    %c0_192 = arith.constant 0 : index
    %122 = vector.load %arg8[%c16, %c0_192] : memref<24x180xf32, #tpu.memory_space<vmem>>, vector<8x12xf32>
    tpu.vector_store %arg8[%c16, %c0_192], %121 {strides = array<i32>} : memref<24x180xf32, #tpu.memory_space<vmem>>, vector<8x12xf32>,
    %c2_193 = arith.constant 2 : index
    %c0_194 = arith.constant 0 : index
    %c1_195 = arith.constant 1 : index
    %c0_196 = arith.constant 0 : index
    %123 = vector.load %arg7[%c2_193, %c0_194, %c1_195, %c0_196] : memref<3x3x12x12xf32, #tpu.memory_space<vmem>>, vector<1x1x8x12xf32>
    %124 = vector.shape_cast %123 : vector<1x1x8x12xf32> to vector<8x12xf32>
    %c16_197 = arith.constant 16 : index
    %c12_198 = arith.constant 12 : index
    %125 = vector.load %arg8[%c16_197, %c12_198] : memref<24x180xf32, #tpu.memory_space<vmem>>, vector<8x12xf32>
    tpu.vector_store %arg8[%c16_197, %c12_198], %124 {strides = array<i32>} : memref<24x180xf32, #tpu.memory_space<vmem>>, vector<8x12xf32>,
    %c2_199 = arith.constant 2 : index
    %c0_200 = arith.constant 0 : index
    %c2_201 = arith.constant 2 : index
    %c0_202 = arith.constant 0 : index
    %126 = vector.load %arg7[%c2_199, %c0_200, %c2_201, %c0_202] : memref<3x3x12x12xf32, #tpu.memory_space<vmem>>, vector<1x1x8x12xf32>
    %127 = vector.shape_cast %126 : vector<1x1x8x12xf32> to vector<8x12xf32>
    %c16_203 = arith.constant 16 : index
    %c24_204 = arith.constant 24 : index
    %128 = vector.load %arg8[%c16_203, %c24_204] : memref<24x180xf32, #tpu.memory_space<vmem>>, vector<8x12xf32>
    tpu.vector_store %arg8[%c16_203, %c24_204], %127 {strides = array<i32>} : memref<24x180xf32, #tpu.memory_space<vmem>>, vector<8x12xf32>,
    %c2_205 = arith.constant 2 : index
    %c0_206 = arith.constant 0 : index
    %c3_207 = arith.constant 3 : index
    %c0_208 = arith.constant 0 : index
    %129 = vector.load %arg7[%c2_205, %c0_206, %c3_207, %c0_208] : memref<3x3x12x12xf32, #tpu.memory_space<vmem>>, vector<1x1x8x12xf32>
    %130 = vector.shape_cast %129 : vector<1x1x8x12xf32> to vector<8x12xf32>
    %c16_209 = arith.constant 16 : index
    %c36_210 = arith.constant 36 : index
    %131 = vector.load %arg8[%c16_209, %c36_210] : memref<24x180xf32, #tpu.memory_space<vmem>>, vector<8x12xf32>
    tpu.vector_store %arg8[%c16_209, %c36_210], %130 {strides = array<i32>} : memref<24x180xf32, #tpu.memory_space<vmem>>, vector<8x12xf32>,
    %c2_211 = arith.constant 2 : index
    %c0_212 = arith.constant 0 : index
    %c4_213 = arith.constant 4 : index
    %c0_214 = arith.constant 0 : index
    %132 = vector.load %arg7[%c2_211, %c0_212, %c4_213, %c0_214] : memref<3x3x12x12xf32, #tpu.memory_space<vmem>>, vector<1x1x8x12xf32>
    %133 = vector.shape_cast %132 : vector<1x1x8x12xf32> to vector<8x12xf32>
    %c16_215 = arith.constant 16 : index
    %c48_216 = arith.constant 48 : index
    %134 = vector.load %arg8[%c16_215, %c48_216] : memref<24x180xf32, #tpu.memory_space<vmem>>, vector<8x12xf32>
    tpu.vector_store %arg8[%c16_215, %c48_216], %133 {strides = array<i32>} : memref<24x180xf32, #tpu.memory_space<vmem>>, vector<8x12xf32>,
    %c2_217 = arith.constant 2 : index
    %c1_218 = arith.constant 1 : index
    %c0_219 = arith.constant 0 : index
    %c0_220 = arith.constant 0 : index
    %135 = vector.load %arg7[%c2_217, %c1_218, %c0_219, %c0_220] : memref<3x3x12x12xf32, #tpu.memory_space<vmem>>, vector<1x1x8x12xf32>
    %136 = vector.shape_cast %135 : vector<1x1x8x12xf32> to vector<8x12xf32>
    %c16_221 = arith.constant 16 : index
    %c60_222 = arith.constant 60 : index
    %137 = vector.load %arg8[%c16_221, %c60_222] : memref<24x180xf32, #tpu.memory_space<vmem>>, vector<8x12xf32>
    tpu.vector_store %arg8[%c16_221, %c60_222], %136 {strides = array<i32>} : memref<24x180xf32, #tpu.memory_space<vmem>>, vector<8x12xf32>,
    %c2_223 = arith.constant 2 : index
    %c1_224 = arith.constant 1 : index
    %c1_225 = arith.constant 1 : index
    %c0_226 = arith.constant 0 : index
    %138 = vector.load %arg7[%c2_223, %c1_224, %c1_225, %c0_226] : memref<3x3x12x12xf32, #tpu.memory_space<vmem>>, vector<1x1x8x12xf32>
    %139 = vector.shape_cast %138 : vector<1x1x8x12xf32> to vector<8x12xf32>
    %c16_227 = arith.constant 16 : index
    %c72_228 = arith.constant 72 : index
    %140 = vector.load %arg8[%c16_227, %c72_228] : memref<24x180xf32, #tpu.memory_space<vmem>>, vector<8x12xf32>
    tpu.vector_store %arg8[%c16_227, %c72_228], %139 {strides = array<i32>} : memref<24x180xf32, #tpu.memory_space<vmem>>, vector<8x12xf32>,
    %c2_229 = arith.constant 2 : index
    %c1_230 = arith.constant 1 : index
    %c2_231 = arith.constant 2 : index
    %c0_232 = arith.constant 0 : index
    %141 = vector.load %arg7[%c2_229, %c1_230, %c2_231, %c0_232] : memref<3x3x12x12xf32, #tpu.memory_space<vmem>>, vector<1x1x8x12xf32>
    %142 = vector.shape_cast %141 : vector<1x1x8x12xf32> to vector<8x12xf32>
    %c16_233 = arith.constant 16 : index
    %c84_234 = arith.constant 84 : index
    %143 = vector.load %arg8[%c16_233, %c84_234] : memref<24x180xf32, #tpu.memory_space<vmem>>, vector<8x12xf32>
    tpu.vector_store %arg8[%c16_233, %c84_234], %142 {strides = array<i32>} : memref<24x180xf32, #tpu.memory_space<vmem>>, vector<8x12xf32>,
    %c2_235 = arith.constant 2 : index
    %c1_236 = arith.constant 1 : index
    %c3_237 = arith.constant 3 : index
    %c0_238 = arith.constant 0 : index
    %144 = vector.load %arg7[%c2_235, %c1_236, %c3_237, %c0_238] : memref<3x3x12x12xf32, #tpu.memory_space<vmem>>, vector<1x1x8x12xf32>
    %145 = vector.shape_cast %144 : vector<1x1x8x12xf32> to vector<8x12xf32>
    %c16_239 = arith.constant 16 : index
    %c96_240 = arith.constant 96 : index
    %146 = vector.load %arg8[%c16_239, %c96_240] : memref<24x180xf32, #tpu.memory_space<vmem>>, vector<8x12xf32>
    tpu.vector_store %arg8[%c16_239, %c96_240], %145 {strides = array<i32>} : memref<24x180xf32, #tpu.memory_space<vmem>>, vector<8x12xf32>,
    %c2_241 = arith.constant 2 : index
    %c1_242 = arith.constant 1 : index
    %c4_243 = arith.constant 4 : index
    %c0_244 = arith.constant 0 : index
    %147 = vector.load %arg7[%c2_241, %c1_242, %c4_243, %c0_244] : memref<3x3x12x12xf32, #tpu.memory_space<vmem>>, vector<1x1x8x12xf32>
    %148 = vector.shape_cast %147 : vector<1x1x8x12xf32> to vector<8x12xf32>
    %c16_245 = arith.constant 16 : index
    %c108_246 = arith.constant 108 : index
    %149 = vector.load %arg8[%c16_245, %c108_246] : memref<24x180xf32, #tpu.memory_space<vmem>>, vector<8x12xf32>
    tpu.vector_store %arg8[%c16_245, %c108_246], %148 {strides = array<i32>} : memref<24x180xf32, #tpu.memory_space<vmem>>, vector<8x12xf32>,
    %c2_247 = arith.constant 2 : index
    %c2_248 = arith.constant 2 : index
    %c0_249 = arith.constant 0 : index
    %c0_250 = arith.constant 0 : index
    %150 = vector.load %arg7[%c2_247, %c2_248, %c0_249, %c0_250] : memref<3x3x12x12xf32, #tpu.memory_space<vmem>>, vector<1x1x8x12xf32>
    %151 = vector.shape_cast %150 : vector<1x1x8x12xf32> to vector<8x12xf32>
    %c16_251 = arith.constant 16 : index
    %c120_252 = arith.constant 120 : index
    %152 = vector.load %arg8[%c16_251, %c120_252] : memref<24x180xf32, #tpu.memory_space<vmem>>, vector<8x12xf32>
    tpu.vector_store %arg8[%c16_251, %c120_252], %151 {strides = array<i32>} : memref<24x180xf32, #tpu.memory_space<vmem>>, vector<8x12xf32>,
    %c2_253 = arith.constant 2 : index
    %c2_254 = arith.constant 2 : index
    %c1_255 = arith.constant 1 : index
    %c0_256 = arith.constant 0 : index
    %153 = vector.load %arg7[%c2_253, %c2_254, %c1_255, %c0_256] : memref<3x3x12x12xf32, #tpu.memory_space<vmem>>, vector<1x1x8x12xf32>
    %154 = vector.shape_cast %153 : vector<1x1x8x12xf32> to vector<8x12xf32>
    %c16_257 = arith.constant 16 : index
    %c132_258 = arith.constant 132 : index
    %155 = vector.load %arg8[%c16_257, %c132_258] : memref<24x180xf32, #tpu.memory_space<vmem>>, vector<8x12xf32>
    tpu.vector_store %arg8[%c16_257, %c132_258], %154 {strides = array<i32>} : memref<24x180xf32, #tpu.memory_space<vmem>>, vector<8x12xf32>,
    %c2_259 = arith.constant 2 : index
    %c2_260 = arith.constant 2 : index
    %c2_261 = arith.constant 2 : index
    %c0_262 = arith.constant 0 : index
    %156 = vector.load %arg7[%c2_259, %c2_260, %c2_261, %c0_262] : memref<3x3x12x12xf32, #tpu.memory_space<vmem>>, vector<1x1x8x12xf32>
    %157 = vector.shape_cast %156 : vector<1x1x8x12xf32> to vector<8x12xf32>
    %c16_263 = arith.constant 16 : index
    %c144_264 = arith.constant 144 : index
    %158 = vector.load %arg8[%c16_263, %c144_264] : memref<24x180xf32, #tpu.memory_space<vmem>>, vector<8x12xf32>
    tpu.vector_store %arg8[%c16_263, %c144_264], %157 {strides = array<i32>} : memref<24x180xf32, #tpu.memory_space<vmem>>, vector<8x12xf32>,
    %c2_265 = arith.constant 2 : index
    %c2_266 = arith.constant 2 : index
    %c3_267 = arith.constant 3 : index
    %c0_268 = arith.constant 0 : index
    %159 = vector.load %arg7[%c2_265, %c2_266, %c3_267, %c0_268] : memref<3x3x12x12xf32, #tpu.memory_space<vmem>>, vector<1x1x8x12xf32>
    %160 = vector.shape_cast %159 : vector<1x1x8x12xf32> to vector<8x12xf32>
    %c16_269 = arith.constant 16 : index
    %c156_270 = arith.constant 156 : index
    %161 = vector.load %arg8[%c16_269, %c156_270] : memref<24x180xf32, #tpu.memory_space<vmem>>, vector<8x12xf32>
    tpu.vector_store %arg8[%c16_269, %c156_270], %160 {strides = array<i32>} : memref<24x180xf32, #tpu.memory_space<vmem>>, vector<8x12xf32>,
    %c2_271 = arith.constant 2 : index
    %c2_272 = arith.constant 2 : index
    %c4_273 = arith.constant 4 : index
    %c0_274 = arith.constant 0 : index
    %162 = vector.load %arg7[%c2_271, %c2_272, %c4_273, %c0_274] : memref<3x3x12x12xf32, #tpu.memory_space<vmem>>, vector<1x1x8x12xf32>
    %163 = vector.shape_cast %162 : vector<1x1x8x12xf32> to vector<8x12xf32>
    %c16_275 = arith.constant 16 : index
    %c168_276 = arith.constant 168 : index
    %164 = vector.load %arg8[%c16_275, %c168_276] : memref<24x180xf32, #tpu.memory_space<vmem>>, vector<8x12xf32>
    tpu.vector_store %arg8[%c16_275, %c168_276], %163 {strides = array<i32>} : memref<24x180xf32, #tpu.memory_space<vmem>>, vector<8x12xf32>,
    %c0_277 = arith.constant 0 : index
    %c0_278 = arith.constant 0 : index
    %165 = vector.load %arg8[%c0_277, %c0_278] : memref<24x180xf32, #tpu.memory_space<vmem>>, vector<24x180xf32>
    %c0_279 = arith.constant 0 : index
    %c0_280 = arith.constant 0 : index
    %166 = vector.load %arg5[%c0_279, %c0_280] : memref<180x64xf32, #tpu.memory_space<vmem>>, vector<180x64xf32>
    %cst_281 = arith.constant dense<0.000000e+00> : vector<24x64xf32>
    %167 = tpu.matmul %165, %166, %cst_281 {dimension_numbers = #tpu.dot_dimension_numbers<[1], [0], [0], [1], [0, 0, 1, 1], [], []>} : vector<24x180xf32>, vector<180x64xf32>, vector<24x64xf32> -> vector<24x64xf32>
    %cst_282 = arith.constant 9.99999997E-7 : f32
    %168 = vector.broadcast %cst_282 : f32 to vector<24x64xf32>
    %169 = arith.addf %167, %168 : vector<24x64xf32>
    %170 = arith.mulf %169, %169 : vector<24x64xf32>
    %171 = vector.extract_strided_slice %170 {offsets = [0, 0], sizes = [24, 8], strides = [1, 1]} : vector<24x64xf32> to vector<24x8xf32>
    %172 = vector.extract_strided_slice %170 {offsets = [0, 8], sizes = [24, 8], strides = [1, 1]} : vector<24x64xf32> to vector<24x8xf32>
    %173 = arith.addf %171, %172 : vector<24x8xf32>
    %174 = vector.extract_strided_slice %170 {offsets = [0, 16], sizes = [24, 8], strides = [1, 1]} : vector<24x64xf32> to vector<24x8xf32>
    %175 = arith.addf %173, %174 : vector<24x8xf32>
    %176 = vector.extract_strided_slice %170 {offsets = [0, 24], sizes = [24, 8], strides = [1, 1]} : vector<24x64xf32> to vector<24x8xf32>
    %177 = arith.addf %175, %176 : vector<24x8xf32>
    %178 = vector.extract_strided_slice %170 {offsets = [0, 32], sizes = [24, 8], strides = [1, 1]} : vector<24x64xf32> to vector<24x8xf32>
    %179 = arith.addf %177, %178 : vector<24x8xf32>
    %180 = vector.extract_strided_slice %170 {offsets = [0, 40], sizes = [24, 8], strides = [1, 1]} : vector<24x64xf32> to vector<24x8xf32>
    %181 = arith.addf %179, %180 : vector<24x8xf32>
    %182 = vector.extract_strided_slice %170 {offsets = [0, 48], sizes = [24, 8], strides = [1, 1]} : vector<24x64xf32> to vector<24x8xf32>
    %183 = arith.addf %181, %182 : vector<24x8xf32>
    %184 = vector.extract_strided_slice %170 {offsets = [0, 56], sizes = [24, 8], strides = [1, 1]} : vector<24x64xf32> to vector<24x8xf32>
    %185 = arith.addf %183, %184 : vector<24x8xf32>
    %186 = math.sqrt %185 : vector<24x8xf32>
    %c0_283 = arith.constant 0 : index
    %c0_284 = arith.constant 0 : index
    %c0_285 = arith.constant 0 : index
    %187 = vector.load %arg6[%c0_283, %c0_284, %c0_285] : memref<1x24x8xf32, #tpu.memory_space<vmem>>, vector<1x24x8xf32>
    %188 = vector.shape_cast %187 : vector<1x24x8xf32> to vector<24x8xf32>
    %189 = vector.shape_cast %186 : vector<24x8xf32> to vector<1x24x8xf32>
    tpu.vector_store %arg6[%c0_283, %c0_284, %c0_285], %189 {strides = array<i32>} : memref<1x24x8xf32, #tpu.memory_space<vmem>>, vector<1x24x8xf32>,
    return
  }
  func.func @transform_0(%arg0: i32) -> (i32, i32, i32, i32, i32) {
    %c0_i32 = arith.constant 0 : i32
    %c0_i32_0 = arith.constant 0 : i32
    %c0_i32_1 = arith.constant 0 : i32
    %c0_i32_2 = arith.constant 0 : i32
    %c0_i32_3 = arith.constant 0 : i32
    return %arg0, %c0_i32, %c0_i32_0, %c0_i32_1, %c0_i32_2 : i32, i32, i32, i32, i32
  }
  func.func @transform_1(%arg0: i32) -> (i32, i32, i32, i32, i32) {
    %c0_i32 = arith.constant 0 : i32
    %c0_i32_0 = arith.constant 0 : i32
    %c0_i32_1 = arith.constant 0 : i32
    %c0_i32_2 = arith.constant 0 : i32
    %c0_i32_3 = arith.constant 0 : i32
    return %arg0, %c0_i32, %c0_i32_0, %c0_i32_1, %c0_i32_2 : i32, i32, i32, i32, i32
  }
  func.func @transform_2(%arg0: i32) -> (i32, i32, i32, i32, i32) {
    %c0_i32 = arith.constant 0 : i32
    %c0_i32_0 = arith.constant 0 : i32
    %c0_i32_1 = arith.constant 0 : i32
    %c0_i32_2 = arith.constant 0 : i32
    %c0_i32_3 = arith.constant 0 : i32
    return %arg0, %c0_i32, %c0_i32_0, %c0_i32_1, %c0_i32_2 : i32, i32, i32, i32, i32
  }
  func.func @transform_3(%arg0: i32) -> (i32, i32, i32, i32, i32) {
    %c0_i32 = arith.constant 0 : i32
    %c0_i32_0 = arith.constant 0 : i32
    %c0_i32_1 = arith.constant 0 : i32
    %c0_i32_2 = arith.constant 0 : i32
    %c0_i32_3 = arith.constant 0 : i32
    return %arg0, %c0_i32, %c0_i32_0, %c0_i32_1, %c0_i32_2 : i32, i32, i32, i32, i32
  }
  func.func @transform_4(%arg0: i32) -> (i32, i32) {
    %c0_i32 = arith.constant 0 : i32
    %c0_i32_0 = arith.constant 0 : i32
    %c0_i32_1 = arith.constant 0 : i32
    return %c0_i32, %c0_i32_0 : i32, i32
  }
  func.func @transform_5(%arg0: i32) -> (i32, i32, i32) {
    %c0_i32 = arith.constant 0 : i32
    %c0_i32_0 = arith.constant 0 : i32
    %c0_i32_1 = arith.constant 0 : i32
    return %arg0, %c0_i32, %c0_i32_0 : i32, i32, i32
  }
}

</mosaic_0001>

<llo_original>
// kernel: mm_pa_forward.1
$region0: #{mm_pa_forward.1}
  #allocation0 [shape = 'u32[]', space=smem, size = 0x4, offset = 0x4, fixed_abs, tag = 'smem constant byte address 0x4 - core index']
  #allocation1 [shape = 'u32[144,128]{1,0:T(1,128)}', space=vmem, size = 0x12000, scoped, tag = 'internal scratch']
  #allocation2 [shape = 'f32[3,3,12,12]{3,2,1,0:T(8,128)}', space=vmem, size = 0x12000, scoped, tag = 'scratch operand']
  #allocation3 [shape = 'f32[24,180]{1,0:T(8,128)}', space=vmem, size = 0x6000, scoped, tag = 'scratch operand']
  %s0 = inlined_call_operand.vmem [shape: f32[2,4,3,9,9], index: 0, kind: input, shape index: {}]
  %s1 = inlined_call_operand.vmem [shape: f32[2,4,3,9,9], index: 1, kind: input, shape index: {}]
  %s2 = inlined_call_operand.vmem [shape: f32[2,4,3,9,9], index: 2, kind: input, shape index: {}]
  %s3 = inlined_call_operand.vmem [shape: f32[2,4,3,9,9], index: 3, kind: input, shape index: {}]
  %s4 = inlined_call_operand.vmem [shape: f32[180,64], index: 4, kind: input, shape index: {}]
  %s5 = inlined_call_operand.vmem [shape: f32[2,24,8], index: 5, kind: output, shape index: {}]
  %s6 = sld [smem:[#allocation0]]
  $region53: #{mm_pa_forward.1} parent=0
    _
  %s8 = ssub.s32 1, %s6
  %s9 = scalar_select 0, %s8, %s6
  loop: start=0, step=1, limit=4
  $region2: #{mm_pa_forward.1} parent=0 // loop_pre_header
    _
  $region3: #{mm_pa_forward.1} parent=0 // loop_header
    %s11 = sphi 0, %s15
    %p12 = scmp.ge.s32.totalorder %s11, 4
    %s21 = sphi 0, %s23
    %s24 = sphi 0, %s21
    %s25 = sphi 0, %s24
    %s41 = sphi 0, %s25
    %s47 = sphi 0, %s49
    %s50 = sphi 0, %s47
    %s51 = sphi 0, %s50
    %s67 = sphi 0, %s51
    %s73 = sphi 0, %s75
    %s76 = sphi 0, %s73
    %s77 = sphi 0, %s76
    %s93 = sphi 0, %s77
    %s99 = sphi 0, %s101
    %s102 = sphi 0, %s99
    %s103 = sphi 0, %s102
    %s119 = sphi 0, %s103
    %s123 = sphi 0, %s123
    %s125 = sphi 0, %s123
    %s126 = sphi 0, %s125
    %s140 = sphi 0, %s126
    %s146 = sphi 0, %s148
    %s149 = sphi 0, %s146
    %s150 = sphi 0, %s149
    %s166 = sphi 0, %s150
  $region4: #{mm_pa_forward.1} parent=0 // loop_header_branch
    %14 = sbr.rel (%p12) target = $region8
  $region5: #{mm_pa_forward.1} parent=0 // loop_body
    %s16 = ssub.s32 %s11, 1
    %s17 = ssub.s32 %s11, 2
    %s18 = sadd.s32 %s11, 1
    %s19 = ssub.s32 %s11, %s18
    %p20 = scmp.eq.s32.totalorder %s19, 0
    %s22 = sadd.s32 %s21, 1
    %s23 = scalar_select %p20, %s21, %s22
    %p26 = pneg %p20
    %p27 = scmp.eq.s32.totalorder %s11, 1
    %p28 = por %p26, %p27
    %p29 = scmp.ne.s32.totalorder %s21, %s24
    %p30 = scmp.eq.s32.totalorder %s11, 0
    %p31 = por %p29, %p30
    %p32 = scmp.ne.s32.totalorder %s21, %s24
    %p33 = scmp.eq.s32.totalorder %s16, 1
    %p34 = por %p32, %p33
    %p35 = scmp.ne.s32.totalorder %s24, %s25
    %p36 = scmp.eq.s32.totalorder %s16, 0
    %p37 = por %p35, %p36
    %p38 = scmp.ne.s32.totalorder %s24, %s25
    %p39 = scmp.eq.s32.totalorder %s17, 1
    %p40 = por %p38, %p39
    %p42 = scmp.ne.s32.totalorder %s25, %s41
    %p43 = scmp.eq.s32.totalorder %s17, 0
    %p44 = por %p42, %p43
    %s45 = ssub.s32 %s11, %s18
    %p46 = scmp.eq.s32.totalorder %s45, 0
    %s48 = sadd.s32 %s47, 1
    %s49 = scalar_select %p46, %s47, %s48
    %p52 = pneg %p46
    %p53 = scmp.eq.s32.totalorder %s11, 1
    %p54 = por %p52, %p53
    %p55 = scmp.ne.s32.totalorder %s47, %s50
    %p56 = scmp.eq.s32.totalorder %s11, 0
    %p57 = por %p55, %p56
    %p58 = scmp.ne.s32.totalorder %s47, %s50
    %p59 = scmp.eq.s32.totalorder %s16, 1
    %p60 = por %p58, %p59
    %p61 = scmp.ne.s32.totalorder %s50, %s51
    %p62 = scmp.eq.s32.totalorder %s16, 0
    %p63 = por %p61, %p62
    %p64 = scmp.ne.s32.totalorder %s50, %s51
    %p65 = scmp.eq.s32.totalorder %s17, 1
    %p66 = por %p64, %p65
    %p68 = scmp.ne.s32.totalorder %s51, %s67
    %p69 = scmp.eq.s32.totalorder %s17, 0
    %p70 = por %p68, %p69
    %s71 = ssub.s32 %s11, %s18
    %p72 = scmp.eq.s32.totalorder %s71, 0
    %s74 = sadd.s32 %s73, 1
    %s75 = scalar_select %p72, %s73, %s74
    %p78 = pneg %p72
    %p79 = scmp.eq.s32.totalorder %s11, 1
    %p80 = por %p78, %p79
    %p81 = scmp.ne.s32.totalorder %s73, %s76
    %p82 = scmp.eq.s32.totalorder %s11, 0
    %p83 = por %p81, %p82
    %p84 = scmp.ne.s32.totalorder %s73, %s76
    %p85 = scmp.eq.s32.totalorder %s16, 1
    %p86 = por %p84, %p85
    %p87 = scmp.ne.s32.totalorder %s76, %s77
    %p88 = scmp.eq.s32.totalorder %s16, 0
    %p89 = por %p87, %p88
    %p90 = scmp.ne.s32.totalorder %s76, %s77
    %p91 = scmp.eq.s32.totalorder %s17, 1
    %p92 = por %p90, %p91
    %p94 = scmp.ne.s32.totalorder %s77, %s93
    %p95 = scmp.eq.s32.totalorder %s17, 0
    %p96 = por %p94, %p95
    %s97 = ssub.s32 %s11, %s18
    %p98 = scmp.eq.s32.totalorder %s97, 0
    %s100 = sadd.s32 %s99, 1
    %s101 = scalar_select %p98, %s99, %s100
    %p104 = pneg %p98
    %p105 = scmp.eq.s32.totalorder %s11, 1
    %p106 = por %p104, %p105
    %p107 = scmp.ne.s32.totalorder %s99, %s102
    %p108 = scmp.eq.s32.totalorder %s11, 0
    %p109 = por %p107, %p108
    %p110 = scmp.ne.s32.totalorder %s99, %s102
    %p111 = scmp.eq.s32.totalorder %s16, 1
    %p112 = por %p110, %p111
    %p113 = scmp.ne.s32.totalorder %s102, %s103
    %p114 = scmp.eq.s32.totalorder %s16, 0
    %p115 = por %p113, %p114
    %p116 = scmp.ne.s32.totalorder %s102, %s103
    %p117 = scmp.eq.s32.totalorder %s17, 1
    %p118 = por %p116, %p117
    %p120 = scmp.ne.s32.totalorder %s103, %s119
    %p121 = scmp.eq.s32.totalorder %s17, 0
    %p122 = por %p120, %p121
    %s124 = sadd.s32 %s123, 1
    %p127 = scmp.eq.s32.totalorder %s11, 1
    %p128 = scmp.ne.s32.totalorder %s123, %s125
    %p129 = scmp.eq.s32.totalorder %s11, 0
    %p130 = por %p128, %p129
    %p131 = scmp.ne.s32.totalorder %s123, %s125
    %p132 = scmp.eq.s32.totalorder %s16, 1
    %p133 = por %p131, %p132
    %p134 = scmp.ne.s32.totalorder %s125, %s126
    %p135 = scmp.eq.s32.totalorder %s16, 0
    %p136 = por %p134, %p135
    %p137 = scmp.ne.s32.totalorder %s125, %s126
    %p138 = scmp.eq.s32.totalorder %s17, 1
    %p139 = por %p137, %p138
    %p141 = scmp.ne.s32.totalorder %s126, %s140
    %p142 = scmp.eq.s32.totalorder %s17, 0
    %p143 = por %p141, %p142
    %s144 = ssub.s32 %s11, %s18
    %p145 = scmp.eq.s32.totalorder %s144, 0
    %s147 = sadd.s32 %s146, 1
    %s148 = scalar_select %p145, %s146, %s147
    %p151 = pneg %p145
    %p152 = scmp.eq.s32.totalorder %s11, 1
    %p153 = por %p151, %p152
    %p154 = scmp.ne.s32.totalorder %s146, %s149
    %p155 = scmp.eq.s32.totalorder %s11, 0
    %p156 = por %p154, %p155
    %p157 = scmp.ne.s32.totalorder %s146, %s149
    %p158 = scmp.eq.s32.totalorder %s16, 1
    %p159 = por %p157, %p158
    %p160 = scmp.ne.s32.totalorder %s149, %s150
    %p161 = scmp.eq.s32.totalorder %s16, 0
    %p162 = por %p160, %p161
    %p163 = scmp.ne.s32.totalorder %s149, %s150
    %p164 = scmp.eq.s32.totalorder %s17, 1
    %p165 = por %p163, %p164
    %p167 = scmp.ne.s32.totalorder %s150, %s166
    %p168 = scmp.eq.s32.totalorder %s17, 0
    %p169 = por %p167, %p168
    %p170 = scmp.le.s32.totalorder 1, %s11
    %p171 = scmp.lt.s32.totalorder %s11, 3
    %p172 = pnand %p170, %p171
    %p173 = pneg %p172
    // Predicated region
    $region9: #{mm_pa_forward.1} parent=5 // pred_check
      _
    $region10: #{mm_pa_forward.1} parent=5 // pred_check_branch
      %175 = sbr.rel (%p172) target = $region12
    $region11: #{mm_pa_forward.1} parent=5 // pred_region
      %s176 = ssub.s32 %s11, 1
      // Predicated region
      $region13: #{mm_pa_forward.1} parent=11 // pred_check
        %p177 = pneg %p136
      $region14: #{mm_pa_forward.1} parent=11 // pred_check_branch
        %179 = sbr.rel (%p177) target = $region16
      $region15: #{mm_pa_forward.1} parent=11 // pred_region
        _
      $region16: #{mm_pa_forward.1} parent=11 // pred_fallthru
        _
    $region12: #{mm_pa_forward.1} parent=5 // pred_fallthru
      _
    %p180 = scmp.lt.s32.totalorder %s11, 2
    // Predicated region
    $region17: #{mm_pa_forward.1} parent=5 // pred_check
      %p181 = pneg %p180
    $region18: #{mm_pa_forward.1} parent=5 // pred_check_branch
      %183 = sbr.rel (%p181) target = $region20
    $region19: #{mm_pa_forward.1} parent=5 // pred_region
      // Predicated region
      $region21: #{mm_pa_forward.1} parent=19 // pred_check
        %p184 = pneg %p31
      $region22: #{mm_pa_forward.1} parent=19 // pred_check_branch
        %186 = sbr.rel (%p184) target = $region24
      $region23: #{mm_pa_forward.1} parent=19 // pred_region
        %p187 = scmp.lt.s32.totalorder %s11, 1
        %s188 = scalar_select %p187, %s11, 1
        %s189 = smul.addr %s188, 24
        %s190 = smul.addr %s189, 8
        %s191 = scalar_lea.vmem %s0, %s190
      $region24: #{mm_pa_forward.1} parent=19 // pred_fallthru
        _
      // Predicated region
      $region25: #{mm_pa_forward.1} parent=19 // pred_check
        %p192 = pneg %p57
      $region26: #{mm_pa_forward.1} parent=19 // pred_check_branch
        %194 = sbr.rel (%p192) target = $region28
      $region27: #{mm_pa_forward.1} parent=19 // pred_region
        %p195 = scmp.lt.s32.totalorder %s11, 1
        %s196 = scalar_select %p195, %s11, 1
        %s197 = smul.addr %s196, 24
        %s198 = smul.addr %s197, 8
        %s199 = scalar_lea.vmem %s1, %s198
      $region28: #{mm_pa_forward.1} parent=19 // pred_fallthru
        _
      // Predicated region
      $region29: #{mm_pa_forward.1} parent=19 // pred_check
        %p200 = pneg %p83
      $region30: #{mm_pa_forward.1} parent=19 // pred_check_branch
        %202 = sbr.rel (%p200) target = $region32
      $region31: #{mm_pa_forward.1} parent=19 // pred_region
        %p203 = scmp.lt.s32.totalorder %s11, 1
        %s204 = scalar_select %p203, %s11, 1
        %s205 = smul.addr %s204, 24
        %s206 = smul.addr %s205, 8
        %s207 = scalar_lea.vmem %s2, %s206
      $region32: #{mm_pa_forward.1} parent=19 // pred_fallthru
        _
      // Predicated region
      $region33: #{mm_pa_forward.1} parent=19 // pred_check
        %p208 = pneg %p109
      $region34: #{mm_pa_forward.1} parent=19 // pred_check_branch
        %210 = sbr.rel (%p208) target = $region36
      $region35: #{mm_pa_forward.1} parent=19 // pred_region
        %p211 = scmp.lt.s32.totalorder %s11, 1
        %s212 = scalar_select %p211, %s11, 1
        %s213 = smul.addr %s212, 24
        %s214 = smul.addr %s213, 8
        %s215 = scalar_lea.vmem %s3, %s214
      $region36: #{mm_pa_forward.1} parent=19 // pred_fallthru
        _
    $region20: #{mm_pa_forward.1} parent=5 // pred_fallthru
      _
    %p216 = scmp.le.s32.totalorder 1, %s11
    %p217 = scmp.lt.s32.totalorder %s11, 3
    %p218 = pnand %p216, %p217
    %p219 = pneg %p218
    // Predicated region
    $region37: #{mm_pa_forward.1} parent=5 // pred_check
      _
    $region38: #{mm_pa_forward.1} parent=5 // pred_check_branch
      %221 = sbr.rel (%p218) target = $region40
    $region39: #{mm_pa_forward.1} parent=5 // pred_region
      %s222 = ssub.s32 %s11, 1
      %p223 = scmp.lt.s32.totalorder %s16, 1
      %s224 = scalar_select %p223, %s16, 1
      %s225 = smul.addr %s224, 24
      %s226 = smul.addr %s225, 8
      %s227 = scalar_lea.vmem %s0, %s226
      %p228 = pneg %p37
      %p229 = pneg %p34
      %p230 = scmp.lt.s32.totalorder %s16, 1
      %s231 = scalar_select %p230, %s16, 1
      %s232 = smul.addr %s231, 24
      %s233 = smul.addr %s232, 8
      %s234 = scalar_lea.vmem %s1, %s233
      %p235 = pneg %p63
      %p236 = pneg %p60
      %p237 = scmp.lt.s32.totalorder %s16, 1
      %s238 = scalar_select %p237, %s16, 1
      %s239 = smul.addr %s238, 24
      %s240 = smul.addr %s239, 8
      %s241 = scalar_lea.vmem %s2, %s240
      %p242 = pneg %p89
      %p243 = pneg %p86
      %p244 = scmp.lt.s32.totalorder %s16, 1
      %s245 = scalar_select %p244, %s16, 1
      %s246 = smul.addr %s245, 24
      %s247 = smul.addr %s246, 8
      %s248 = scalar_lea.vmem %s3, %s247
      %p249 = pneg %p115
      %p250 = pneg %p112
      %p251 = pneg %p136
      %p252 = pneg %p133
      %p253 = pneg %p162
      %p254 = pneg %p159
      %p255 = scmp.lt.s32.totalorder %s16, 1
      %s256 = scalar_select %p255, %s16, 1
      %s257 = smul.addr %s256, 3
      %s258 = smul.addr %s257, 8
      %s259 = scalar_lea.vmem %s5, %s258
      %p260 = scmp.lt.s32.totalorder %s16, 1
      %s261 = scalar_select %p260, %s16, 1
      %s262 = smul.addr %s261, 24
      %s263 = smul.addr %s262, 8
      %s264 = scalar_lea.vmem %s0, %s263
      %p265 = scmp.lt.s32.totalorder %s16, 1
      %s266 = scalar_select %p265, %s16, 1
      %s267 = smul.addr %s266, 24
      %s268 = smul.addr %s267, 8
      %s269 = scalar_lea.vmem %s1, %s268
      %p270 = scmp.lt.s32.totalorder %s16, 1
      %s271 = scalar_select %p270, %s16, 1
      %s272 = smul.addr %s271, 24
      %s273 = smul.addr %s272, 8
      %s274 = scalar_lea.vmem %s2, %s273
      %p275 = scmp.lt.s32.totalorder %s16, 1
      %s276 = scalar_select %p275, %s16, 1
      %s277 = smul.addr %s276, 24
      %s278 = smul.addr %s277, 8
      %s279 = scalar_lea.vmem %s3, %s278
      %p280 = scmp.lt.s32.totalorder %s16, 1
      %s281 = scalar_select %p280, %s16, 1
      %s282 = smul.addr %s281, 3
      %s283 = smul.addr %s282, 8
      %s284 = scalar_lea.vmem %s5, %s283
      %v285 = vld [vmem:[%s264] sm:$0xff]
      %v286 = vld [vmem:[%s264 + $0x8] sm:$0x1]
      %v287 = vld [vmem:[%s264 + $0x10] sm:$0xff]
      %v288 = vld [vmem:[%s264 + $0x18] sm:$0x1]
      %v289 = vld [vmem:[%s264 + $0x20] sm:$0xff]
      %v290 = vld [vmem:[%s264 + $0x28] sm:$0x1]
      %v291 = vld [vmem:[%s264 + $0x30] sm:$0xff]
      %v292 = vld [vmem:[%s264 + $0x38] sm:$0x1]
      %v293 = vld [vmem:[%s264 + $0x40] sm:$0xff]
      %v294 = vld [vmem:[%s264 + $0x48] sm:$0x1]
      %v295 = vld [vmem:[%s264 + $0x50] sm:$0xff]
      %v296 = vld [vmem:[%s264 + $0x58] sm:$0x1]
      %v297 = vld [vmem:[%s264 + $0x60] sm:$0xff]
      %v298 = vld [vmem:[%s264 + $0x68] sm:$0x1]
      %v299 = vld [vmem:[%s264 + $0x70] sm:$0xff]
      %v300 = vld [vmem:[%s264 + $0x78] sm:$0x1]
      %v301 = vld [vmem:[%s264 + $0x80] sm:$0xff]
      %v302 = vld [vmem:[%s264 + $0x88] sm:$0x1]
      %v303 = vld [vmem:[%s264 + $0x90] sm:$0xff]
      %v304 = vld [vmem:[%s264 + $0x98] sm:$0x1]
      %v305 = vld [vmem:[%s264 + $0xa0] sm:$0xff]
      %v306 = vld [vmem:[%s264 + $0xa8] sm:$0x1]
      %v307 = vld [vmem:[%s264 + $0xb0] sm:$0xff]
      %v308 = vld [vmem:[%s264 + $0xb8] sm:$0x1]
      %v309 = vld [vmem:[%s269] sm:$0xff]
      %v310 = vld [vmem:[%s269 + $0x8] sm:$0x1]
      %v311 = vld [vmem:[%s269 + $0x10] sm:$0xff]
      %v312 = vld [vmem:[%s269 + $0x18] sm:$0x1]
      %v313 = vld [vmem:[%s269 + $0x20] sm:$0xff]
      %v314 = vld [vmem:[%s269 + $0x28] sm:$0x1]
      %v315 = vld [vmem:[%s269 + $0x30] sm:$0xff]
      %v316 = vld [vmem:[%s269 + $0x38] sm:$0x1]
      %v317 = vld [vmem:[%s269 + $0x40] sm:$0xff]
      %v318 = vld [vmem:[%s269 + $0x48] sm:$0x1]
      %v319 = vld [vmem:[%s269 + $0x50] sm:$0xff]
      %v320 = vld [vmem:[%s269 + $0x58] sm:$0x1]
      %v321 = vld [vmem:[%s269 + $0x60] sm:$0xff]
      %v322 = vld [vmem:[%s269 + $0x68] sm:$0x1]
      %v323 = vld [vmem:[%s269 + $0x70] sm:$0xff]
      %v324 = vld [vmem:[%s269 + $0x78] sm:$0x1]
      %v325 = vld [vmem:[%s269 + $0x80] sm:$0xff]
      %v326 = vld [vmem:[%s269 + $0x88] sm:$0x1]
      %v327 = vld [vmem:[%s269 + $0x90] sm:$0xff]
      %v328 = vld [vmem:[%s269 + $0x98] sm:$0x1]
      %v329 = vld [vmem:[%s269 + $0xa0] sm:$0xff]
      %v330 = vld [vmem:[%s269 + $0xa8] sm:$0x1]
      %v331 = vld [vmem:[%s269 + $0xb0] sm:$0xff]
      %v332 = vld [vmem:[%s269 + $0xb8] sm:$0x1]
      %v333 = vld [vmem:[%s274] sm:$0xff]
      %v334 = vld [vmem:[%s274 + $0x10] sm:$0xff]
      %v335 = vld [vmem:[%s274 + $0x20] sm:$0xff]
      %v336 = vld [vmem:[%s274 + $0x30] sm:$0xff]
      %v337 = vld [vmem:[%s274 + $0x40] sm:$0xff]
      %v338 = vld [vmem:[%s274 + $0x50] sm:$0xff]
      %v339 = vld [vmem:[%s274 + $0x60] sm:$0xff]
      %v340 = vld [vmem:[%s274 + $0x70] sm:$0xff]
      %v341 = vld [vmem:[%s274 + $0x80] sm:$0xff]
      %v342 = vld [vmem:[%s274 + $0x90] sm:$0xff]
      %v343 = vld [vmem:[%s274 + $0xa0] sm:$0xff]
      %v344 = vld [vmem:[%s274 + $0xb0] sm:$0xff]
      %v345 = vld [vmem:[%s279] sm:$0xff]
      %v346 = vld [vmem:[%s279 + $0x10] sm:$0xff]
      %v347 = vld [vmem:[%s279 + $0x20] sm:$0xff]
      %v348 = vld [vmem:[%s279 + $0x30] sm:$0xff]
      %v349 = vld [vmem:[%s279 + $0x40] sm:$0xff]
      %v350 = vld [vmem:[%s279 + $0x50] sm:$0xff]
      %v351 = vld [vmem:[%s279 + $0x60] sm:$0xff]
      %v352 = vld [vmem:[%s279 + $0x70] sm:$0xff]
      %v353 = vld [vmem:[%s279 + $0x80] sm:$0xff]
      %v354 = vld [vmem:[%s279 + $0x90] sm:$0xff]
      %v355 = vld [vmem:[%s279 + $0xa0] sm:$0xff]
      %v356 = vld [vmem:[%s279 + $0xb0] sm:$0xff]
      %v357 = vmax.f32 %v285, %v309
      %v358 = vmax.f32 %v286, %v310
      %v359 = vmax.f32 %v287, %v311
      %v360 = vmax.f32 %v288, %v312
      %v361 = vmax.f32 %v289, %v313
      %v362 = vmax.f32 %v290, %v314
      %v363 = vmax.f32 %v291, %v315
      %v364 = vmax.f32 %v292, %v316
      %v365 = vmax.f32 %v293, %v317
      %v366 = vmax.f32 %v294, %v318
      %v367 = vmax.f32 %v295, %v319
      %v368 = vmax.f32 %v296, %v320
      %v369 = vmax.f32 %v297, %v321
      %v370 = vmax.f32 %v298, %v322
      %v371 = vmax.f32 %v299, %v323
      %v372 = vmax.f32 %v300, %v324
      %v373 = vmax.f32 %v301, %v325
      %v374 = vmax.f32 %v302, %v326
      %v375 = vmax.f32 %v303, %v327
      %v376 = vmax.f32 %v304, %v328
      %v377 = vmax.f32 %v305, %v329
      %v378 = vmax.f32 %v306, %v330
      %v379 = vmax.f32 %v307, %v331
      %v380 = vmax.f32 %v308, %v332
      %405 = vrot.lane.b32.xlu0 %v285, 127
      %v406 = vpop.permute.xlu0 %405
      %407 = vrot.lane.b32.xlu0 %v286, 127
      %v408 = vpop.permute.xlu0 %407
      %409 = vrot.lane.b32.xlu0 %v287, 127
      %v410 = vpop.permute.xlu0 %409
      %411 = vrot.lane.b32.xlu0 %v288, 127
      %v412 = vpop.permute.xlu0 %411
      %413 = vrot.lane.b32.xlu0 %v289, 127
      %v414 = vpop.permute.xlu0 %413
      %415 = vrot.lane.b32.xlu0 %v290, 127
      %v416 = vpop.permute.xlu0 %415
      %417 = vrot.lane.b32.xlu0 %v291, 127
      %v418 = vpop.permute.xlu0 %417
      %419 = vrot.lane.b32.xlu0 %v292, 127
      %v420 = vpop.permute.xlu0 %419
      %421 = vrot.lane.b32.xlu0 %v293, 127
      %v422 = vpop.permute.xlu0 %421
      %423 = vrot.lane.b32.xlu0 %v294, 127
      %v424 = vpop.permute.xlu0 %423
      %425 = vrot.lane.b32.xlu0 %v295, 127
      %v426 = vpop.permute.xlu0 %425
      %427 = vrot.lane.b32.xlu0 %v296, 127
      %v428 = vpop.permute.xlu0 %427
      %429 = vrot.lane.b32.xlu0 %v297, 127
      %v430 = vpop.permute.xlu0 %429
      %431 = vrot.lane.b32.xlu0 %v298, 127
      %v432 = vpop.permute.xlu0 %431
      %433 = vrot.lane.b32.xlu0 %v299, 127
      %v434 = vpop.permute.xlu0 %433
      %435 = vrot.lane.b32.xlu0 %v300, 127
      %v436 = vpop.permute.xlu0 %435
      %437 = vrot.lane.b32.xlu0 %v301, 127
      %v438 = vpop.permute.xlu0 %437
      %439 = vrot.lane.b32.xlu0 %v302, 127
      %v440 = vpop.permute.xlu0 %439
      %441 = vrot.lane.b32.xlu0 %v303, 127
      %v442 = vpop.permute.xlu0 %441
      %443 = vrot.lane.b32.xlu0 %v304, 127
      %v444 = vpop.permute.xlu0 %443
      %445 = vrot.lane.b32.xlu0 %v305, 127
      %v446 = vpop.permute.xlu0 %445
      %447 = vrot.lane.b32.xlu0 %v306, 127
      %v448 = vpop.permute.xlu0 %447
      %449 = vrot.lane.b32.xlu0 %v307, 127
      %v450 = vpop.permute.xlu0 %449
      %451 = vrot.lane.b32.xlu0 %v308, 127
      %v452 = vpop.permute.xlu0 %451
      %v477 = vmax.f32 %v357, %v406
      %v478 = vmax.f32 %v358, %v408
      %v479 = vmax.f32 %v359, %v410
      %v480 = vmax.f32 %v360, %v412
      %v481 = vmax.f32 %v361, %v414
      %v482 = vmax.f32 %v362, %v416
      %v483 = vmax.f32 %v363, %v418
      %v484 = vmax.f32 %v364, %v420
      %v485 = vmax.f32 %v365, %v422
      %v486 = vmax.f32 %v366, %v424
      %v487 = vmax.f32 %v367, %v426
      %v488 = vmax.f32 %v368, %v428
      %v489 = vmax.f32 %v369, %v430
      %v490 = vmax.f32 %v370, %v432
      %v491 = vmax.f32 %v371, %v434
      %v492 = vmax.f32 %v372, %v436
      %v493 = vmax.f32 %v373, %v438
      %v494 = vmax.f32 %v374, %v440
      %v495 = vmax.f32 %v375, %v442
      %v496 = vmax.f32 %v376, %v444
      %v497 = vmax.f32 %v377, %v446
      %v498 = vmax.f32 %v378, %v448
      %v499 = vmax.f32 %v379, %v450
      %v500 = vmax.f32 %v380, %v452
      %v501 = vmax.f32 %v333, %v345
      %v502 = vmax.f32 %v334, %v346
      %v503 = vmax.f32 %v335, %v347
      %v504 = vmax.f32 %v336, %v348
      %v505 = vmax.f32 %v337, %v349
      %v506 = vmax.f32 %v338, %v350
      %v507 = vmax.f32 %v339, %v351
      %v508 = vmax.f32 %v340, %v352
      %v509 = vmax.f32 %v341, %v353
      %v510 = vmax.f32 %v342, %v354
      %v511 = vmax.f32 %v343, %v355
      %v512 = vmax.f32 %v344, %v356
      %525 = vrot.lane.b32.xlu0 %v333, 127
      %v526 = vpop.permute.xlu0 %525
      %527 = vrot.lane.b32.xlu0 %v334, 127
      %v528 = vpop.permute.xlu0 %527
      %529 = vrot.lane.b32.xlu0 %v335, 127
      %v530 = vpop.permute.xlu0 %529
      %531 = vrot.lane.b32.xlu0 %v336, 127
      %v532 = vpop.permute.xlu0 %531
      %533 = vrot.lane.b32.xlu0 %v337, 127
      %v534 = vpop.permute.xlu0 %533
      %535 = vrot.lane.b32.xlu0 %v338, 127
      %v536 = vpop.permute.xlu0 %535
      %537 = vrot.lane.b32.xlu0 %v339, 127
      %v538 = vpop.permute.xlu0 %537
      %539 = vrot.lane.b32.xlu0 %v340, 127
      %v540 = vpop.permute.xlu0 %539
      %541 = vrot.lane.b32.xlu0 %v341, 127
      %v542 = vpop.permute.xlu0 %541
      %543 = vrot.lane.b32.xlu0 %v342, 127
      %v544 = vpop.permute.xlu0 %543
      %545 = vrot.lane.b32.xlu0 %v343, 127
      %v546 = vpop.permute.xlu0 %545
      %547 = vrot.lane.b32.xlu0 %v344, 127
      %v548 = vpop.permute.xlu0 %547
      %v561 = vmax.f32 %v501, %v526
      %v562 = vmax.f32 %v502, %v528
      %v563 = vmax.f32 %v503, %v530
      %v564 = vmax.f32 %v504, %v532
      %v565 = vmax.f32 %v505, %v534
      %v566 = vmax.f32 %v506, %v536
      %v567 = vmax.f32 %v507, %v538
      %v568 = vmax.f32 %v508, %v540
      %v569 = vmax.f32 %v509, %v542
      %v570 = vmax.f32 %v510, %v544
      %v571 = vmax.f32 %v511, %v546
      %v572 = vmax.f32 %v512, %v548
      %v573 = vmax.f32 %v477, %v561
      %v574 = vmax.f32 %v479, %v562
      %v575 = vmax.f32 %v481, %v563
      %v576 = vmax.f32 %v483, %v564
      %v577 = vmax.f32 %v485, %v565
      %v578 = vmax.f32 %v487, %v566
      %v579 = vmax.f32 %v489, %v567
      %v580 = vmax.f32 %v491, %v568
      %v581 = vmax.f32 %v493, %v569
      %v582 = vmax.f32 %v495, %v570
      %v583 = vmax.f32 %v497, %v571
      %v584 = vmax.f32 %v499, %v572
      %vm609 = vcmask 1046528
      %v610 = vrot.slane %v477, 1
      %v611 = vrot.slane %v478, 1
      %v612 = vsel %vm609, %v610, %v611
      %v613 = vrot.slane %v479, 1
      %v614 = vrot.slane %v480, 1
      %v615 = vsel %vm609, %v613, %v614
      %v616 = vrot.slane %v481, 1
      %v617 = vrot.slane %v482, 1
      %v618 = vsel %vm609, %v616, %v617
      %v619 = vrot.slane %v483, 1
      %v620 = vrot.slane %v484, 1
      %v621 = vsel %vm609, %v619, %v620
      %v622 = vrot.slane %v485, 1
      %v623 = vrot.slane %v486, 1
      %v624 = vsel %vm609, %v622, %v623
      %v625 = vrot.slane %v487, 1
      %v626 = vrot.slane %v488, 1
      %v627 = vsel %vm609, %v625, %v626
      %v628 = vrot.slane %v489, 1
      %v629 = vrot.slane %v490, 1
      %v630 = vsel %vm609, %v628, %v629
      %v631 = vrot.slane %v491, 1
      %v632 = vrot.slane %v492, 1
      %v633 = vsel %vm609, %v631, %v632
      %v634 = vrot.slane %v493, 1
      %v635 = vrot.slane %v494, 1
      %v636 = vsel %vm609, %v634, %v635
      %v637 = vrot.slane %v495, 1
      %v638 = vrot.slane %v496, 1
      %v639 = vsel %vm609, %v637, %v638
      %v640 = vrot.slane %v497, 1
      %v641 = vrot.slane %v498, 1
      %v642 = vsel %vm609, %v640, %v641
      %v643 = vrot.slane %v499, 1
      %v644 = vrot.slane %v500, 1
      %v645 = vsel %vm609, %v643, %v644
      %v658 = vmax.f32 %v573, %v612
      %v659 = vmax.f32 %v574, %v615
      %v660 = vmax.f32 %v575, %v618
      %v661 = vmax.f32 %v576, %v621
      %v662 = vmax.f32 %v577, %v624
      %v663 = vmax.f32 %v578, %v627
      %v664 = vmax.f32 %v579, %v630
      %v665 = vmax.f32 %v580, %v633
      %v666 = vmax.f32 %v581, %v636
      %v667 = vmax.f32 %v582, %v639
      %v668 = vmax.f32 %v583, %v642
      %v669 = vmax.f32 %v584, %v645
      %v670 = vsub.f32 %v658, %v667
      %v671 = vsub.f32 %v659, %v668
      %v672 = vsub.f32 %v660, %v669
      %v673 = vsub.f32 %v661, %v667
      %v674 = vsub.f32 %v662, %v668
      %v675 = vsub.f32 %v663, %v669
      %v676 = vsub.f32 %v664, %v667
      %v677 = vsub.f32 %v665, %v668
      %v678 = vsub.f32 %v666, %v669
      %vm679 = vcmask 97280
      %680 = vst.msk [vmem:[#allocation2] sm:$0xff] %vm679, 0.0
      %vm681 = vcmask 93184
      %682 = vst.msk [vmem:[#allocation2 + $0x8] sm:$0xf] %vm681, 0.0
      %683 = vst.msk [vmem:[#allocation2 + $0x10] sm:$0xff] %vm679, 0.0
      %684 = vst.msk [vmem:[#allocation2 + $0x18] sm:$0xf] %vm681, 0.0
      %685 = vst.msk [vmem:[#allocation2 + $0x20] sm:$0xff] %vm679, 0.0
      %686 = vst.msk [vmem:[#allocation2 + $0x28] sm:$0xf] %vm681, 0.0
      %687 = vst.msk [vmem:[#allocation2 + $0x30] sm:$0xff] %vm679, 0.0
      %688 = vst.msk [vmem:[#allocation2 + $0x38] sm:$0xf] %vm681, 0.0
      %689 = vst.msk [vmem:[#allocation2 + $0x40] sm:$0xff] %vm679, 0.0
      %690 = vst.msk [vmem:[#allocation2 + $0x48] sm:$0xf] %vm681, 0.0
      %691 = vst.msk [vmem:[#allocation2 + $0x50] sm:$0xff] %vm679, 0.0
      %692 = vst.msk [vmem:[#allocation2 + $0x58] sm:$0xf] %vm681, 0.0
      %693 = vst.msk [vmem:[#allocation2 + $0x60] sm:$0xff] %vm679, 0.0
      %694 = vst.msk [vmem:[#allocation2 + $0x68] sm:$0xf] %vm681, 0.0
      %695 = vst.msk [vmem:[#allocation2 + $0x70] sm:$0xff] %vm679, 0.0
      %696 = vst.msk [vmem:[#allocation2 + $0x78] sm:$0xf] %vm681, 0.0
      %697 = vst.msk [vmem:[#allocation2 + $0x80] sm:$0xff] %vm679, 0.0
      %698 = vst.msk [vmem:[#allocation2 + $0x88] sm:$0xf] %vm681, 0.0
      %708 = vrot.lane.b32.xlu0 %v670, 2
      %v709 = vpop.permute.xlu0 %708
      %710 = vrot.lane.b32.xlu0 %v671, 2
      %v711 = vpop.permute.xlu0 %710
      %712 = vrot.lane.b32.xlu0 %v672, 2
      %v713 = vpop.permute.xlu0 %712
      %714 = vrot.lane.b32.xlu0 %v673, 2
      %v715 = vpop.permute.xlu0 %714
      %716 = vrot.lane.b32.xlu0 %v674, 2
      %v717 = vpop.permute.xlu0 %716
      %718 = vrot.lane.b32.xlu0 %v675, 2
      %v719 = vpop.permute.xlu0 %718
      %720 = vrot.lane.b32.xlu0 %v676, 2
      %v721 = vpop.permute.xlu0 %720
      %722 = vrot.lane.b32.xlu0 %v677, 2
      %v723 = vpop.permute.xlu0 %722
      %724 = vrot.lane.b32.xlu0 %v678, 2
      %v725 = vpop.permute.xlu0 %724
      %vm735 = vcmask 80912
      %736 = vst.msk [vmem:[#allocation2 + $0x2] sm:$0xff] %vm735, %v709
      %737 = vst.msk [vmem:[#allocation2 + $0x12] sm:$0xff] %vm735, %v711
      %738 = vst.msk [vmem:[#allocation2 + $0x22] sm:$0xff] %vm735, %v713
      %739 = vst.msk [vmem:[#allocation2 + $0x32] sm:$0xff] %vm735, %v715
      %740 = vst.msk [vmem:[#allocation2 + $0x42] sm:$0xff] %vm735, %v717
      %741 = vst.msk [vmem:[#allocation2 + $0x52] sm:$0xff] %vm735, %v719
      %742 = vst.msk [vmem:[#allocation2 + $0x62] sm:$0xff] %vm735, %v721
      %743 = vst.msk [vmem:[#allocation2 + $0x72] sm:$0xff] %vm735, %v723
      %744 = vst.msk [vmem:[#allocation2 + $0x82] sm:$0xff] %vm735, %v725
      %v745 = vld [vmem:[#allocation2] sm:$0xff]
      %746 = vst.msk [vmem:[#allocation3] sm:$0xff] %vm679, %v745
      %v747 = vld [vmem:[#allocation2 + $0x1] sm:$0xff]
      %749 = vrot.lane.b32.xlu0 %v747, 12
      %v750 = vpop.permute.xlu0 %749
      %vm752 = vcmask 195680
      %753 = vst.msk [vmem:[#allocation3] sm:$0xff] %vm752, %v750
      %v754 = vld [vmem:[#allocation2 + $0x2] sm:$0xff]
      %756 = vrot.lane.b32.xlu0 %v754, 24
      %v757 = vpop.permute.xlu0 %756
      %vm759 = vcmask 294080
      %760 = vst.msk [vmem:[#allocation3] sm:$0xff] %vm759, %v757
      %v761 = vld [vmem:[#allocation2 + $0x3] sm:$0xff]
      %763 = vrot.lane.b32.xlu0 %v761, 36
      %v764 = vpop.permute.xlu0 %763
      %vm766 = vcmask 392480
      %767 = vst.msk [vmem:[#allocation3] sm:$0xff] %vm766, %v764
      %v768 = vld [vmem:[#allocation2 + $0x4] sm:$0xff]
      %770 = vrot.lane.b32.xlu0 %v768, 48
      %v771 = vpop.permute.xlu0 %770
      %vm773 = vcmask 490880
      %774 = vst.msk [vmem:[#allocation3] sm:$0xff] %vm773, %v771
      %s775 = scalar_lea.vmem [#allocation2], 16
      %v776 = vld [vmem:[%s775] sm:$0xff]
      %778 = vrot.lane.b32.xlu0 %v776, 60
      %v779 = vpop.permute.xlu0 %778
      %vm781 = vcmask 589280
      %782 = vst.msk [vmem:[#allocation3] sm:$0xff] %vm781, %v779
      %v783 = vld [vmem:[%s775 + $0x1] sm:$0xff]
      %785 = vrot.lane.b32.xlu0 %v783, 72
      %v786 = vpop.permute.xlu0 %785
      %vm788 = vcmask 687680
      %789 = vst.msk [vmem:[#allocation3] sm:$0xff] %vm788, %v786
      %v790 = vld [vmem:[%s775 + $0x2] sm:$0xff]
      %792 = vrot.lane.b32.xlu0 %v790, 84
      %v793 = vpop.permute.xlu0 %792
      %vm795 = vcmask 786080
      %796 = vst.msk [vmem:[#allocation3] sm:$0xff] %vm795, %v793
      %v797 = vld [vmem:[%s775 + $0x3] sm:$0xff]
      %799 = vrot.lane.b32.xlu0 %v797, 96
      %v800 = vpop.permute.xlu0 %799
      %vm802 = vcmask 884480
      %803 = vst.msk [vmem:[#allocation3] sm:$0xff] %vm802, %v800
      %v804 = vld [vmem:[%s775 + $0x4] sm:$0xff]
      %806 = vrot.lane.b32.xlu0 %v804, 108
      %v807 = vpop.permute.xlu0 %806
      %vm809 = vcmask 982880
      %810 = vst.msk [vmem:[#allocation3] sm:$0xff] %vm809, %v807
      %s811 = scalar_lea.vmem [#allocation2], 32
      %v812 = vld [vmem:[%s811] sm:$0xff]
      %814 = vrot.lane.b32.xlu0 %v812, 120
      %v815 = vpop.permute.xlu0 %814
      %vm817 = vcmask 1048512
      %818 = vst.msk [vmem:[#allocation3] sm:$0xff] %vm817, %v815
      %vm819 = vcmask 31744
      %820 = vst.msk [vmem:[#allocation3 + $0x8] sm:$0xff] %vm819, %v815
      %v821 = vld [vmem:[%s811 + $0x1] sm:$0xff]
      %823 = vrot.lane.b32.xlu0 %v821, 4
      %v824 = vpop.permute.xlu0 %823
      %vm826 = vcmask 130080
      %827 = vst.msk [vmem:[#allocation3 + $0x8] sm:$0xff] %vm826, %v824
      %v828 = vld [vmem:[%s811 + $0x2] sm:$0xff]
      %830 = vrot.lane.b32.xlu0 %v828, 16
      %v831 = vpop.permute.xlu0 %830
      %vm833 = vcmask 228480
      %834 = vst.msk [vmem:[#allocation3 + $0x8] sm:$0xff] %vm833, %v831
      %v835 = vld [vmem:[%s811 + $0x3] sm:$0xff]
      %837 = vrot.lane.b32.xlu0 %v835, 28
      %v838 = vpop.permute.xlu0 %837
      %vm840 = vcmask 326880
      %841 = vst.msk [vmem:[#allocation3 + $0x8] sm:$0xff] %vm840, %v838
      %v842 = vld [vmem:[%s811 + $0x4] sm:$0xff]
      %844 = vrot.lane.b32.xlu0 %v842, 40
      %v845 = vpop.permute.xlu0 %844
      %vm847 = vcmask 425280
      %848 = vst.msk [vmem:[#allocation3 + $0x8] sm:$0xff] %vm847, %v845
      %s849 = scalar_lea.vmem [#allocation2], 48
      %v850 = vld [vmem:[%s849] sm:$0xff]
      %851 = vst.msk [vmem:[#allocation3 + $0x10] sm:$0xff] %vm679, %v850
      %v852 = vld [vmem:[%s849 + $0x1] sm:$0xff]
      %854 = vrot.lane.b32.xlu0 %v852, 12
      %v855 = vpop.permute.xlu0 %854
      %857 = vst.msk [vmem:[#allocation3 + $0x10] sm:$0xff] %vm752, %v855
      %v858 = vld [vmem:[%s849 + $0x2] sm:$0xff]
      %860 = vrot.lane.b32.xlu0 %v858, 24
      %v861 = vpop.permute.xlu0 %860
      %863 = vst.msk [vmem:[#allocation3 + $0x10] sm:$0xff] %vm759, %v861
      %v864 = vld [vmem:[%s849 + $0x3] sm:$0xff]
      %866 = vrot.lane.b32.xlu0 %v864, 36
      %v867 = vpop.permute.xlu0 %866
      %869 = vst.msk [vmem:[#allocation3 + $0x10] sm:$0xff] %vm766, %v867
      %v870 = vld [vmem:[%s849 + $0x4] sm:$0xff]
      %872 = vrot.lane.b32.xlu0 %v870, 48
      %v873 = vpop.permute.xlu0 %872
      %875 = vst.msk [vmem:[#allocation3 + $0x10] sm:$0xff] %vm773, %v873
      %s876 = scalar_lea.vmem [#allocation2], 64
      %v877 = vld [vmem:[%s876] sm:$0xff]
      %879 = vrot.lane.b32.xlu0 %v877, 60
      %v880 = vpop.permute.xlu0 %879
      %882 = vst.msk [vmem:[#allocation3 + $0x10] sm:$0xff] %vm781, %v880
      %v883 = vld [vmem:[%s876 + $0x1] sm:$0xff]
      %885 = vrot.lane.b32.xlu0 %v883, 72
      %v886 = vpop.permute.xlu0 %885
      %888 = vst.msk [vmem:[#allocation3 + $0x10] sm:$0xff] %vm788, %v886
      %v889 = vld [vmem:[%s876 + $0x2] sm:$0xff]
      %891 = vrot.lane.b32.xlu0 %v889, 84
      %v892 = vpop.permute.xlu0 %891
      %894 = vst.msk [vmem:[#allocation3 + $0x10] sm:$0xff] %vm795, %v892
      %v895 = vld [vmem:[%s876 + $0x3] sm:$0xff]
      %897 = vrot.lane.b32.xlu0 %v895, 96
      %v898 = vpop.permute.xlu0 %897
      %900 = vst.msk [vmem:[#allocation3 + $0x10] sm:$0xff] %vm802, %v898
      %v901 = vld [vmem:[%s876 + $0x4] sm:$0xff]
      %903 = vrot.lane.b32.xlu0 %v901, 108
      %v904 = vpop.permute.xlu0 %903
      %906 = vst.msk [vmem:[#allocation3 + $0x10] sm:$0xff] %vm809, %v904
      %s907 = scalar_lea.vmem [#allocation2], 80
      %v908 = vld [vmem:[%s907] sm:$0xff]
      %910 = vrot.lane.b32.xlu0 %v908, 120
      %v911 = vpop.permute.xlu0 %910
      %913 = vst.msk [vmem:[#allocation3 + $0x10] sm:$0xff] %vm817, %v911
      %914 = vst.msk [vmem:[#allocation3 + $0x18] sm:$0xff] %vm819, %v911
      %v915 = vld [vmem:[%s907 + $0x1] sm:$0xff]
      %917 = vrot.lane.b32.xlu0 %v915, 4
      %v918 = vpop.permute.xlu0 %917
      %920 = vst.msk [vmem:[#allocation3 + $0x18] sm:$0xff] %vm826, %v918
      %v921 = vld [vmem:[%s907 + $0x2] sm:$0xff]
      %923 = vrot.lane.b32.xlu0 %v921, 16
      %v924 = vpop.permute.xlu0 %923
      %926 = vst.msk [vmem:[#allocation3 + $0x18] sm:$0xff] %vm833, %v924
      %v927 = vld [vmem:[%s907 + $0x3] sm:$0xff]
      %929 = vrot.lane.b32.xlu0 %v927, 28
      %v930 = vpop.permute.xlu0 %929
      %932 = vst.msk [vmem:[#allocation3 + $0x18] sm:$0xff] %vm840, %v930
      %v933 = vld [vmem:[%s907 + $0x4] sm:$0xff]
      %935 = vrot.lane.b32.xlu0 %v933, 40
      %v936 = vpop.permute.xlu0 %935
      %938 = vst.msk [vmem:[#allocation3 + $0x18] sm:$0xff] %vm847, %v936
      %s939 = scalar_lea.vmem [#allocation2], 96
      %v940 = vld [vmem:[%s939] sm:$0xff]
      %941 = vst.msk [vmem:[#allocation3 + $0x20] sm:$0xff] %vm679, %v940
      %v942 = vld [vmem:[%s939 + $0x1] sm:$0xff]
      %944 = vrot.lane.b32.xlu0 %v942, 12
      %v945 = vpop.permute.xlu0 %944
      %947 = vst.msk [vmem:[#allocation3 + $0x20] sm:$0xff] %vm752, %v945
      %v948 = vld [vmem:[%s939 + $0x2] sm:$0xff]
      %950 = vrot.lane.b32.xlu0 %v948, 24
      %v951 = vpop.permute.xlu0 %950
      %953 = vst.msk [vmem:[#allocation3 + $0x20] sm:$0xff] %vm759, %v951
      %v954 = vld [vmem:[%s939 + $0x3] sm:$0xff]
      %956 = vrot.lane.b32.xlu0 %v954, 36
      %v957 = vpop.permute.xlu0 %956
      %959 = vst.msk [vmem:[#allocation3 + $0x20] sm:$0xff] %vm766, %v957
      %v960 = vld [vmem:[%s939 + $0x4] sm:$0xff]
      %962 = vrot.lane.b32.xlu0 %v960, 48
      %v963 = vpop.permute.xlu0 %962
      %965 = vst.msk [vmem:[#allocation3 + $0x20] sm:$0xff] %vm773, %v963
      %s966 = scalar_lea.vmem [#allocation2], 112
      %v967 = vld [vmem:[%s966] sm:$0xff]
      %969 = vrot.lane.b32.xlu0 %v967, 60
      %v970 = vpop.permute.xlu0 %969
      %972 = vst.msk [vmem:[#allocation3 + $0x20] sm:$0xff] %vm781, %v970
      %v973 = vld [vmem:[%s966 + $0x1] sm:$0xff]
      %975 = vrot.lane.b32.xlu0 %v973, 72
      %v976 = vpop.permute.xlu0 %975
      %978 = vst.msk [vmem:[#allocation3 + $0x20] sm:$0xff] %vm788, %v976
      %v979 = vld [vmem:[%s966 + $0x2] sm:$0xff]
      %981 = vrot.lane.b32.xlu0 %v979, 84
      %v982 = vpop.permute.xlu0 %981
      %984 = vst.msk [vmem:[#allocation3 + $0x20] sm:$0xff] %vm795, %v982
      %v985 = vld [vmem:[%s966 + $0x3] sm:$0xff]
      %987 = vrot.lane.b32.xlu0 %v985, 96
      %v988 = vpop.permute.xlu0 %987
      %990 = vst.msk [vmem:[#allocation3 + $0x20] sm:$0xff] %vm802, %v988
      %v991 = vld [vmem:[%s966 + $0x4] sm:$0xff]
      %993 = vrot.lane.b32.xlu0 %v991, 108
      %v994 = vpop.permute.xlu0 %993
      %996 = vst.msk [vmem:[#allocation3 + $0x20] sm:$0xff] %vm809, %v994
      %s997 = scalar_lea.vmem [#allocation2], 128
      %v998 = vld [vmem:[%s997] sm:$0xff]
      %1000 = vrot.lane.b32.xlu0 %v998, 120
      %v1001 = vpop.permute.xlu0 %1000
      %1003 = vst.msk [vmem:[#allocation3 + $0x20] sm:$0xff] %vm817, %v1001
      %1004 = vst.msk [vmem:[#allocation3 + $0x28] sm:$0xff] %vm819, %v1001
      %v1005 = vld [vmem:[%s997 + $0x1] sm:$0xff]
      %1007 = vrot.lane.b32.xlu0 %v1005, 4
      %v1008 = vpop.permute.xlu0 %1007
      %1010 = vst.msk [vmem:[#allocation3 + $0x28] sm:$0xff] %vm826, %v1008
      %v1011 = vld [vmem:[%s997 + $0x2] sm:$0xff]
      %1013 = vrot.lane.b32.xlu0 %v1011, 16
      %v1014 = vpop.permute.xlu0 %1013
      %1016 = vst.msk [vmem:[#allocation3 + $0x28] sm:$0xff] %vm833, %v1014
      %v1017 = vld [vmem:[%s997 + $0x3] sm:$0xff]
      %1019 = vrot.lane.b32.xlu0 %v1017, 28
      %v1020 = vpop.permute.xlu0 %1019
      %1022 = vst.msk [vmem:[#allocation3 + $0x28] sm:$0xff] %vm840, %v1020
      %v1023 = vld [vmem:[%s997 + $0x4] sm:$0xff]
      %1025 = vrot.lane.b32.xlu0 %v1023, 40
      %v1026 = vpop.permute.xlu0 %1025
      %1028 = vst.msk [vmem:[#allocation3 + $0x28] sm:$0xff] %vm847, %v1026
      %v1029 = vld [vmem:[#allocation3] sm:$0xff]
      %v1030 = vld [vmem:[#allocation3 + $0x8] sm:$0xff]
      %v1031 = vld [vmem:[#allocation3 + $0x10] sm:$0xff]
      %v1032 = vld [vmem:[#allocation3 + $0x18] sm:$0xff]
      %v1033 = vld [vmem:[#allocation3 + $0x20] sm:$0xff]
      %v1034 = vld [vmem:[#allocation3 + $0x28] sm:$0xff]
      %v1035 = vld [vmem:[%s4] sm:$0xff]
      %v1036 = vld [vmem:[%s4 + $0x8] sm:$0xff]
      %v1037 = vld [vmem:[%s4 + $0x10] sm:$0xff]
      %v1038 = vld [vmem:[%s4 + $0x18] sm:$0xff]
      %v1039 = vld [vmem:[%s4 + $0x20] sm:$0xff]
      %v1040 = vld [vmem:[%s4 + $0x28] sm:$0xff]
      %v1041 = vld [vmem:[%s4 + $0x30] sm:$0xff]
      %v1042 = vld [vmem:[%s4 + $0x38] sm:$0xff]
      %v1043 = vld [vmem:[%s4 + $0x40] sm:$0xff]
      %v1044 = vld [vmem:[%s4 + $0x48] sm:$0xff]
      %v1045 = vld [vmem:[%s4 + $0x50] sm:$0xff]
      %v1046 = vld [vmem:[%s4 + $0x58] sm:$0xff]
      %v1047 = vld [vmem:[%s4 + $0x60] sm:$0xff]
      %v1048 = vld [vmem:[%s4 + $0x68] sm:$0xff]
      %v1049 = vld [vmem:[%s4 + $0x70] sm:$0xff]
      %v1050 = vld [vmem:[%s4 + $0x78] sm:$0xff]
      %v1051 = vld [vmem:[%s4 + $0x80] sm:$0xff]
      %v1052 = vld [vmem:[%s4 + $0x88] sm:$0xff]
      %v1053 = vld [vmem:[%s4 + $0x90] sm:$0xff]
      %v1054 = vld [vmem:[%s4 + $0x98] sm:$0xff]
      %v1055 = vld [vmem:[%s4 + $0xa0] sm:$0xff]
      %v1056 = vld [vmem:[%s4 + $0xa8] sm:$0xff]
      %v1057 = vld [vmem:[%s4 + $0xb0] sm:$0xf]
      %vm1058 = vcmask 424960
      %v1060 = vsel %vm1058, %v1030, 0
      %v1063 = vsel %vm1058, %v1032, 0
      %v1066 = vsel %vm1058, %v1034, 0
      %vm1068 = vcmask 1043456
      %v1070 = vsel %vm1068, %v1057, 0
      %1072 = vmatprep.subr.mxu0 0.0
      %1073 = vmatpush1.msra.mxu0 %v1035
      %1074 = vmatprep.subr.mxu0 0.0
      %1075 = vmatpush1.msra.mxu0 %v1036
      %1076 = vmatprep.subr.mxu0 0.0
      %1077 = vmatpush1.msra.mxu0 %v1037
      %1078 = vmatprep.subr.mxu0 0.0
      %1079 = vmatpush1.msra.mxu0 %v1038
      %1080 = vmatprep.subr.mxu0 0.0
      %1081 = vmatpush1.msra.mxu0 %v1039
      %1082 = vmatprep.subr.mxu0 0.0
      %1083 = vmatpush1.msra.mxu0 %v1040
      %1084 = vmatprep.subr.mxu0 0.0
      %1085 = vmatpush1.msra.mxu0 %v1041
      %1086 = vmatprep.subr.mxu0 0.0
      %1087 = vmatpush1.msra.mxu0 %v1042
      %1088 = vmatprep.subr.mxu0 0.0
      %1089 = vmatpush1.msra.mxu0 %v1043
      %1090 = vmatprep.subr.mxu0 0.0
      %1091 = vmatpush1.msra.mxu0 %v1044
      %1092 = vmatprep.subr.mxu0 0.0
      %1093 = vmatpush1.msra.mxu0 %v1045
      %1094 = vmatprep.subr.mxu0 0.0
      %1095 = vmatpush1.msra.mxu0 %v1046
      %1096 = vmatprep.subr.mxu0 0.0
      %1097 = vmatpush1.msra.mxu0 %v1047
      %1098 = vmatprep.subr.mxu0 0.0
      %1099 = vmatpush1.msra.mxu0 %v1048
      %1100 = vmatprep.subr.mxu0 0.0
      %1101 = vmatpush1.msra.mxu0 %v1049
      %1102 = vmatprep.subr.mxu0 0.0
      %1103 = vmatpush1.msra.mxu0 %v1050
      %1104 = vmatprep.subr.mxu0 0.0
      %1105 = vmatpush1.msra.mxu0 %v1051
      %1106 = vmatprep.subr.mxu0 0.0
      %1107 = vmatpush1.msra.mxu0 %v1052
      %1108 = vmatprep.subr.mxu0 0.0
      %1109 = vmatpush1.msra.mxu0 %v1053
      %1110 = vmatprep.subr.mxu0 0.0
      %1111 = vmatpush1.msra.mxu0 %v1054
      %1112 = vmatprep.subr.mxu0 0.0
      %1113 = vmatpush1.msra.mxu0 %v1055
      %1114 = vmatprep.subr.mxu0 0.0
      %1115 = vmatpush1.msra.mxu0 %v1056
      %1116 = vmatprep.subr.mxu0 0.0
      %1117 = vmatpush1.msra.mxu0 %v1070
      %1118 = vmatprep.subr.mxu0 0.0
      %1119 = vmatpush1.msra.mxu0 0.0
      %1120 = vmatprep.subr.mxu0 0.0
      %1121 = vmatpush1.msra.mxu0 0.0
      %1122 = vmatprep.subr.mxu0 0.0
      %1123 = vmatpush1.msra.mxu0 0.0
      %1124 = vmatprep.subr.mxu0 0.0
      %1125 = vmatpush1.msra.mxu0 0.0
      %1126 = vmatprep.subr.mxu0 0.0
      %1127 = vmatpush1.msra.mxu0 0.0
      %1128 = vmatprep.subr.mxu0 0.0
      %1129 = vmatpush1.msra.mxu0 0.0
      %1130 = vmatprep.subr.mxu0 0.0
      %1131 = vmatpush1.msra.mxu0 0.0
      %1132 = vmatprep.subr.mxu0 0.0
      %1133 = vmatpush1.msra.mxu0 0.0
      %1134 = vmatprep.subr.mxu0 0.0
      %1135 = vmatpush1.msra.mxu0 0.0
      %1136 = vmatprep.mubr.f32.mxu0 %v1060
      %1137 = vmatmul.mubr.f32.gmra.mrb[0].mxu0 %v1029
      %v1138 = vpop.f32.mrb[0].mxu0
      %v1139 = vadd.f32 1e-06, %v1138
      %v1140 = vpop.f32.mrb[0].mxu0
      %1141 = vmatprep.mubr.f32.mxu0 %v1063
      %1142 = vmatmul.mubr.f32.gmra.mrb[0].mxu0 %v1031
      %v1143 = vpop.f32.mrb[0].mxu0
      %v1144 = vadd.f32 1e-06, %v1143
      %v1145 = vpop.f32.mrb[0].mxu0
      %1146 = vmatprep.mubr.f32.mxu0 %v1066
      %1147 = vmatmul.mubr.f32.gmra.mrb[0].mxu0 %v1033
      %v1148 = vpop.f32.mrb[0].mxu0
      %v1149 = vadd.f32 1e-06, %v1148
      %v1150 = vpop.f32.mrb[0].mxu0
      %1151 = vdwg.mxu0
      %v1152 = vmul.f32 %v1139, %v1139
      %v1153 = vmul.f32 %v1144, %v1144
      %v1154 = vmul.f32 %v1149, %v1149
      %1158 = vrot.lane.b32.xlu0 %v1152, 120
      %v1159 = vpop.permute.xlu0 %1158
      %1160 = vrot.lane.b32.xlu0 %v1153, 120
      %v1161 = vpop.permute.xlu0 %1160
      %1162 = vrot.lane.b32.xlu0 %v1154, 120
      %v1163 = vpop.permute.xlu0 %1162
      %v1167 = vadd.f32 %v1152, %v1159
      %v1168 = vadd.f32 %v1153, %v1161
      %v1169 = vadd.f32 %v1154, %v1163
      %1170 = vrot.lane.b32.xlu0 %v1152, 112
      %v1171 = vpop.permute.xlu0 %1170
      %1172 = vrot.lane.b32.xlu0 %v1153, 112
      %v1173 = vpop.permute.xlu0 %1172
      %1174 = vrot.lane.b32.xlu0 %v1154, 112
      %v1175 = vpop.permute.xlu0 %1174
      %v1179 = vadd.f32 %v1167, %v1171
      %v1180 = vadd.f32 %v1168, %v1173
      %v1181 = vadd.f32 %v1169, %v1175
      %1182 = vrot.lane.b32.xlu0 %v1152, 104
      %v1183 = vpop.permute.xlu0 %1182
      %1184 = vrot.lane.b32.xlu0 %v1153, 104
      %v1185 = vpop.permute.xlu0 %1184
      %1186 = vrot.lane.b32.xlu0 %v1154, 104
      %v1187 = vpop.permute.xlu0 %1186
      %v1191 = vadd.f32 %v1179, %v1183
      %v1192 = vadd.f32 %v1180, %v1185
      %v1193 = vadd.f32 %v1181, %v1187
      %1194 = vrot.lane.b32.xlu0 %v1152, 96
      %v1195 = vpop.permute.xlu0 %1194
      %1196 = vrot.lane.b32.xlu0 %v1153, 96
      %v1197 = vpop.permute.xlu0 %1196
      %1198 = vrot.lane.b32.xlu0 %v1154, 96
      %v1199 = vpop.permute.xlu0 %1198
      %v1203 = vadd.f32 %v1191, %v1195
      %v1204 = vadd.f32 %v1192, %v1197
      %v1205 = vadd.f32 %v1193, %v1199
      %1206 = vrot.lane.b32.xlu0 %v1152, 88
      %v1207 = vpop.permute.xlu0 %1206
      %1208 = vrot.lane.b32.xlu0 %v1153, 88
      %v1209 = vpop.permute.xlu0 %1208
      %1210 = vrot.lane.b32.xlu0 %v1154, 88
      %v1211 = vpop.permute.xlu0 %1210
      %v1215 = vadd.f32 %v1203, %v1207
      %v1216 = vadd.f32 %v1204, %v1209
      %v1217 = vadd.f32 %v1205, %v1211
      %1218 = vrot.lane.b32.xlu0 %v1152, 80
      %v1219 = vpop.permute.xlu0 %1218
      %1220 = vrot.lane.b32.xlu0 %v1153, 80
      %v1221 = vpop.permute.xlu0 %1220
      %1222 = vrot.lane.b32.xlu0 %v1154, 80
      %v1223 = vpop.permute.xlu0 %1222
      %v1227 = vadd.f32 %v1215, %v1219
      %v1228 = vadd.f32 %v1216, %v1221
      %v1229 = vadd.f32 %v1217, %v1223
      %1230 = vrot.lane.b32.xlu0 %v1152, 72
      %v1231 = vpop.permute.xlu0 %1230
      %1232 = vrot.lane.b32.xlu0 %v1153, 72
      %v1233 = vpop.permute.xlu0 %1232
      %1234 = vrot.lane.b32.xlu0 %v1154, 72
      %v1235 = vpop.permute.xlu0 %1234
      %v1239 = vadd.f32 %v1227, %v1231
      %v1240 = vadd.f32 %v1228, %v1233
      %v1241 = vadd.f32 %v1229, %v1235
      %v1242 = vrsqrt.pop %v1239
      %v1243 = vmul.f32 %v1239, %v1242
      %vm1244 = vcmp.eq.f32.partialorder %v1239, inf
      %v1245 = vsel %vm1244, %v1239, %v1243
      %vm1246 = vcmp.eq.f32.partialorder %v1239, 0.0
      %v1247 = vand.u32 %v1239, 2147483648
      %v1248 = vsel %vm1246, %v1247, %v1245
      %v1249 = vrsqrt.pop %v1240
      %v1250 = vmul.f32 %v1240, %v1249
      %vm1251 = vcmp.eq.f32.partialorder %v1240, inf
      %v1252 = vsel %vm1251, %v1240, %v1250
      %vm1253 = vcmp.eq.f32.partialorder %v1240, 0.0
      %v1254 = vand.u32 %v1240, 2147483648
      %v1255 = vsel %vm1253, %v1254, %v1252
      %v1256 = vrsqrt.pop %v1241
      %v1257 = vmul.f32 %v1241, %v1256
      %vm1258 = vcmp.eq.f32.partialorder %v1241, inf
      %v1259 = vsel %vm1258, %v1241, %v1257
      %vm1260 = vcmp.eq.f32.partialorder %v1241, 0.0
      %v1261 = vand.u32 %v1241, 2147483648
      %v1262 = vsel %vm1260, %v1261, %v1259
      %vm1263 = vcmask 64512
      %1264 = vst.msk [vmem:[%s284] sm:$0xff] %vm1263, %v1248
      %1265 = vst.msk [vmem:[%s284 + $0x8] sm:$0xff] %vm1263, %v1255
      %1266 = vst.msk [vmem:[%s284 + $0x10] sm:$0xff] %vm1263, %v1262
      %p1267 = scmp.lt.s32.totalorder %s16, 1
      %s1268 = scalar_select %p1267, %s16, 1
      %s1269 = smul.addr %s1268, 3
      %s1270 = smul.addr %s1269, 8
      %s1271 = scalar_lea.vmem %s5, %s1270
      // Predicated region
      $region41: #{mm_pa_forward.1} parent=39 // pred_check
        %p1272 = pneg %p159
      $region42: #{mm_pa_forward.1} parent=39 // pred_check_branch
        %1274 = sbr.rel (%p1272) target = $region44
      $region43: #{mm_pa_forward.1} parent=39 // pred_region
        _
      $region44: #{mm_pa_forward.1} parent=39 // pred_fallthru
        _
    $region40: #{mm_pa_forward.1} parent=5 // pred_fallthru
      _
    %p1275 = scmp.le.s32.totalorder 2, %s11
    // Predicated region
    $region45: #{mm_pa_forward.1} parent=5 // pred_check
      %p1276 = pneg %p1275
    $region46: #{mm_pa_forward.1} parent=5 // pred_check_branch
      %1278 = sbr.rel (%p1276) target = $region48
    $region47: #{mm_pa_forward.1} parent=5 // pred_region
      %s1279 = ssub.s32 %s11, 2
      // Predicated region
      $region49: #{mm_pa_forward.1} parent=47 // pred_check
        %p1280 = pneg %p165
      $region50: #{mm_pa_forward.1} parent=47 // pred_check_branch
        %1282 = sbr.rel (%p1280) target = $region52
      $region51: #{mm_pa_forward.1} parent=47 // pred_region
        %p1283 = scmp.lt.s32.totalorder %s17, 1
        %s1284 = scalar_select %p1283, %s17, 1
        %s1285 = smul.addr %s1284, 3
        %s1286 = smul.addr %s1285, 8
        %s1287 = scalar_lea.vmem %s5, %s1286
      $region52: #{mm_pa_forward.1} parent=47 // pred_fallthru
        _
    $region48: #{mm_pa_forward.1} parent=5 // pred_fallthru
      _
  $region6: #{mm_pa_forward.1} parent=0 // loop_footer
    %s15 = sadd.s32 1, %s11
  $region7: #{mm_pa_forward.1} parent=0 // loop_footer_branch
    %10 = sbr.rel target = $region3
  $region8: #{mm_pa_forward.1} parent=0 // loop_exit
    _

</llo_original>
